<compile_context>
chip_gen: v7x
topology: tpu7x:2x2x1
jax: 0.10.0
libtpu: 0.0.40
codegen_flags: <defaults>
</compile_context>

<pallas_src>
import functools

import jax
import jax.numpy as jnp
import numpy as np
from jax.experimental import pallas as pl
from jax.experimental.pallas import tpu as pltpu

KS = 7          # spatial-attention kernel size
PAD = KS // 2   # = 3


# --------------------------------------------------------------------------
# Kernel
# --------------------------------------------------------------------------
def _atten_kernel(x_ref, w1t_ref, w2t_ref, wcat_ref, o_ref):
    """x_ref: (Nb, C, HW).  w1t: (C, hid).  w2t: (hid, C).
    wcat: (2*HW, HW) bf16, fused conv-as-matmul weights [wa; wm]."""
    x = x_ref[...].astype(jnp.float32)                       # (Nb, C, HW)
    nb = x.shape[0]

    # ---------------- Channel attention ----------------
    avg = jnp.mean(x, axis=2)                                # AdaptiveAvgPool2d(1) -> (Nb, C)
    mx = jnp.max(x, axis=2)                                  # AdaptiveMaxPool2d(1) -> (Nb, C)
    pooled = jnp.concatenate([avg, mx], axis=0)              # (2*Nb, C): one batched MLP
    h = jnp.maximum(
        jnp.dot(pooled, w1t_ref[...], preferred_element_type=jnp.float32), 0.0)
    out2 = jnp.dot(h, w2t_ref[...], preferred_element_type=jnp.float32)
    ca = jax.nn.sigmoid(out2[:nb] + out2[nb:])               # (Nb, C)

    # Stage channel-attended activations in o_ref (no extra VMEM temporary).
    o_ref[...] = (x * ca[:, :, None]).astype(o_ref.dtype)
    xc = o_ref[...].astype(jnp.float32)                      # (Nb, C, HW)

    # ---------------- Spatial attention ----------------
    # Fused conv-as-matmul: one K=2*HW bf16 MXU dot with f32 accumulation.
    s_cat = jnp.concatenate(
        [jnp.mean(xc, axis=1), jnp.max(xc, axis=1)], axis=-1)  # (Nb, 2*HW)
    logits = jnp.dot(s_cat.astype(wcat_ref.dtype), wcat_ref[...],
                     preferred_element_type=jnp.float32)       # (Nb, HW)
    sa = jax.nn.sigmoid(logits)

    # Final write is unconditional / full-block (trivial revisit semantics).
    o_ref[...] = (xc * sa[:, None, :]).astype(o_ref.dtype)


# --------------------------------------------------------------------------
# Host-side helpers
# --------------------------------------------------------------------------
@functools.lru_cache(maxsize=None)
def _conv_basis(H, W):
    """Numpy basis (KS*KS, HW*HW): basis[tap, p_in*HW + p_out] = 1 where the
    SAME-padded 7x7 cross-correlation tap `tap` maps input pixel p_in to
    output pixel p_out.  Built once per (H, W) on the host."""
    HW = H * W
    basis = np.zeros((KS * KS, HW, HW), np.float32)
    hh, ww = np.meshgrid(np.arange(H), np.arange(W), indexing="ij")
    p_out = (hh * W + ww).reshape(-1)
    for dy in range(KS):
        for dx in range(KS):
            h_in = hh + dy - PAD
            w_in = ww + dx - PAD
            ok = ((h_in >= 0) & (h_in < H) & (w_in >= 0) & (w_in < W)).reshape(-1)
            p_in = np.where(ok, (h_in * W + w_in).reshape(-1), 0)
            basis[dy * KS + dx, p_in[ok], p_out[ok]] = 1.0
    return basis.reshape(KS * KS, HW * HW)


def _round_up(a, b):
    return (a + b - 1) // b * b


def _pick_batch_block(n, per_image_bytes, target_bytes=6 << 20):
    """Images per grid step.  Memory-bound kernel: large blocks (amortize the
    ~0.35us/step overhead, reach HBM roofline), >= 8 rows so the MXU dots are
    not starved; only split into >=2 steps (v7x megacore) for larger batches."""
    nb = max(8, target_bytes // max(per_image_bytes, 1))
    if n >= 16 and nb >= n:
        nb = _round_up((n + 1) // 2, 8)       # >= 2 parallel steps for v7x
    nb = min(nb, _round_up(n, 8))             # don't pad a tiny batch past 8
    return int(nb)


# --------------------------------------------------------------------------
# Wrapper
# --------------------------------------------------------------------------
@jax.jit
def dense_block_with_atten(x, w1, w2, ws):
    """x: (N,C,H,W) f32.  w1: (C//r, C).  w2: (C, C//r).  ws: (2, 7, 7)."""
    N, C, H, W = x.shape
    HW = H * W
    hid = w1.shape[0]

    # Layout plumbing (all under jit, so this is traced/fused once):
    x_flat = x.reshape(N, C, HW)                             # lane-dense view
    w1t = w1.T                                               # (C, hid)
    w2t = w2.T                                               # (hid, C)
    basis = jnp.asarray(_conv_basis(H, W))                   # compile-time constant
    # w_cat = [wa; wm]: (2*HW, HW), bf16 operands for the fused MXU dot.
    w_cat = jnp.dot(ws.reshape(2, KS * KS).astype(jnp.float32),
                    basis).reshape(2 * HW, HW).astype(jnp.bfloat16)

    per_image_bytes = C * HW * x.dtype.itemsize
    nb = _pick_batch_block(N, per_image_bytes)

    # Pad the batch to a full multiple of nb (padded zero-images are
    # independent of real ones; their outputs are sliced away).
    n_pad = _round_up(N, nb)
    if n_pad != N:
        x_flat = jnp.pad(x_flat, ((0, n_pad - N), (0, 0), (0, 0)))
    grid = (n_pad // nb,)

    block_bytes = nb * per_image_bytes
    # 2x double-buffered in + out blocks + staged temporaries + weights.
    vmem_limit = int(min(48 << 20, max(16 << 20, 6 * block_bytes + (2 << 20))))

    out = pl.pallas_call(
        _atten_kernel,
        out_shape=jax.ShapeDtypeStruct((n_pad, C, HW), x.dtype),
        grid_spec=pltpu.PrefetchScalarGridSpec(
            num_scalar_prefetch=0,
            grid=grid,
            in_specs=[
                pl.BlockSpec((nb, C, HW), lambda n: (n, 0, 0)),
                pl.BlockSpec((C, hid), lambda n: (0, 0)),
                pl.BlockSpec((hid, C), lambda n: (0, 0)),
                pl.BlockSpec((2 * HW, HW), lambda n: (0, 0)),
            ],
            out_specs=pl.BlockSpec((nb, C, HW), lambda n: (n, 0, 0)),
        ),
        compiler_params=pltpu.CompilerParams(
            dimension_semantics=("parallel",),
            vmem_limit_bytes=vmem_limit),
    )(x_flat, w1t, w2t, w_cat)

    return out[:N].reshape(N, C, H, W)


# --------------------------------------------------------------------------
# Pure-JAX reference (denseblock = identity)
# --------------------------------------------------------------------------
def _reference(x, w1, w2, ws):
    avg = jnp.mean(x, axis=(2, 3))
    mx = jnp.max(x, axis=(2, 3))

    def mlp(v):
        return jnp.maximum(v @ w1.T, 0.0) @ w2.T

    ca = jax.nn.sigmoid(mlp(avg) + mlp(mx))                  # (N, C)
    x = x * ca[:, :, None, None]
    s_avg = jnp.mean(x, axis=1, keepdims=True)
    s_max = jnp.max(x, axis=1, keepdims=True)
    s = jnp.concatenate([s_avg, s_max], axis=1)              # (N, 2, H, W)
    conv = jax.lax.conv_general_dilated(
        s, ws[None], window_strides=(1, 1),
        padding=[(PAD, PAD), (PAD, PAD)],
        dimension_numbers=("NCHW", "OIHW", "NCHW"))
    sa = jax.nn.sigmoid(conv)                                # (N, 1, H, W)
    return x * sa


if __name__ == "__main__":
    N, C, H, W = 2, 32, 16, 16
    ratio = 16
    hid = C // ratio

    key = jax.random.PRNGKey(0)
    kx, k1, k2, k3 = jax.random.split(key, 4)
    x = jax.random.normal(kx, (N, C, H, W), jnp.float32)
    w1 = jax.random.normal(k1, (hid, C), jnp.float32) * 0.1      # Conv2d(C, C//r, 1)
    w2 = jax.random.normal(k2, (C, hid), jnp.float32) * 0.1      # Conv2d(C//r, C, 1)
    ws = jax.random.normal(k3, (2, KS, KS), jnp.float32) * 0.05  # Conv2d(2, 1, 7)

    out = jax.block_until_ready(dense_block_with_atten(x, w1, w2, ws))
    ref = _reference(x, w1, w2, ws)
    # Tolerance covers default-precision f32 MXU dots (MLP, reference conv)
    # plus the bf16 operands of the fused spatial conv-as-matmul dot.
    np.testing.assert_allclose(np.asarray(out), np.asarray(ref),
                               rtol=1e-2, atol=5e-3)
    print("KERNEL_OK")
</pallas_src>

<mosaic_0001>
module attributes {stable_mosaic.version = 11 : i64} {
  func.func @_atten_kernel(%arg0: i32, %arg1: memref<8x32x256xf32, #tpu.memory_space<vmem>>, %arg2: memref<32x2xf32, #tpu.memory_space<vmem>>, %arg3: memref<2x32xf32, #tpu.memory_space<vmem>>, %arg4: memref<512x256xbf16, #tpu.memory_space<vmem>>, %arg5: memref<8x32x256xf32, #tpu.memory_space<vmem>>) attributes {dimension_semantics = [#tpu.dimension_semantics<parallel>], iteration_bounds = array<i64: 1>, scalar_prefetch = 0 : i64, scratch_operands = 0 : i64, tpu.core_type = #tpu.core_type<tc>, window_params = [{transform_indices = @transform_0, window_bounds = array<i64: 8, 32, 256>}, {pipeline_mode = #tpu.pipeline_mode<synchronous>, transform_indices = @transform_1, window_bounds = array<i64: 32, 2>}, {pipeline_mode = #tpu.pipeline_mode<synchronous>, transform_indices = @transform_2, window_bounds = array<i64: 2, 32>}, {pipeline_mode = #tpu.pipeline_mode<synchronous>, transform_indices = @transform_3, window_bounds = array<i64: 512, 256>}, {transform_indices = @transform_4, window_bounds = array<i64: 8, 32, 256>}]} {
    %c0 = arith.constant 0 : index
    %c0_0 = arith.constant 0 : index
    %c0_1 = arith.constant 0 : index
    %0 = vector.load %arg1[%c0, %c0_0, %c0_1] : memref<8x32x256xf32, #tpu.memory_space<vmem>>, vector<8x32x256xf32>
    %cst = arith.constant dense<0.000000e+00> : vector<8x32xf32>
    %1 = vector.multi_reduction <add>, %0, %cst [2] : vector<8x32x256xf32> to vector<8x32xf32>
    %cst_2 = arith.constant 2.560000e+02 : f32
    %2 = vector.broadcast %cst_2 : f32 to vector<8x32xf32>
    %3 = arith.divf %1, %2 : vector<8x32xf32>
    %cst_3 = arith.constant dense<0xFF800000> : vector<8x32xf32>
    %4 = vector.multi_reduction <maximumf>, %0, %cst_3 [2] : vector<8x32x256xf32> to vector<8x32xf32>
    %5 = tpu.concatenate %3, %4 in 0 : vector<8x32xf32>, vector<8x32xf32> -> vector<16x32xf32>
    %c0_4 = arith.constant 0 : index
    %c0_5 = arith.constant 0 : index
    %6 = vector.load %arg2[%c0_4, %c0_5] : memref<32x2xf32, #tpu.memory_space<vmem>>, vector<32x2xf32>
    %cst_6 = arith.constant dense<0.000000e+00> : vector<16x2xf32>
    %7 = tpu.matmul %5, %6, %cst_6 {dimension_numbers = #tpu.dot_dimension_numbers<[1], [0], [0], [1], [0, 0, 1, 1], [], []>} : vector<16x32xf32>, vector<32x2xf32>, vector<16x2xf32> -> vector<16x2xf32>
    %cst_7 = arith.constant 0.000000e+00 : f32
    %8 = vector.broadcast %cst_7 : f32 to vector<16x2xf32>
    %9 = arith.maximumf %7, %8 : vector<16x2xf32>
    %c0_8 = arith.constant 0 : index
    %c0_9 = arith.constant 0 : index
    %10 = vector.load %arg3[%c0_8, %c0_9] : memref<2x32xf32, #tpu.memory_space<vmem>>, vector<2x32xf32>
    %cst_10 = arith.constant dense<0.000000e+00> : vector<16x32xf32>
    %11 = tpu.matmul %9, %10, %cst_10 {dimension_numbers = #tpu.dot_dimension_numbers<[1], [0], [0], [1], [0, 0, 1, 1], [], []>} : vector<16x2xf32>, vector<2x32xf32>, vector<16x32xf32> -> vector<16x32xf32>
    %12 = vector.extract_strided_slice %11 {offsets = [0, 0], sizes = [8, 32], strides = [1, 1]} : vector<16x32xf32> to vector<8x32xf32>
    %13 = vector.extract_strided_slice %11 {offsets = [8, 0], sizes = [8, 32], strides = [1, 1]} : vector<16x32xf32> to vector<8x32xf32>
    %14 = arith.addf %12, %13 : vector<8x32xf32>
    %15 = arith.negf %14 : vector<8x32xf32>
    %16 = math.exp %15 : vector<8x32xf32>
    %cst_11 = arith.constant 1.000000e+00 : f32
    %17 = vector.broadcast %cst_11 : f32 to vector<8x32xf32>
    %18 = arith.addf %17, %16 : vector<8x32xf32>
    %19 = arith.divf %17, %18 : vector<8x32xf32>
    %20 = vector.shape_cast %19 : vector<8x32xf32> to vector<8x32x1xf32>
    %21 = vector.broadcast %20 : vector<8x32x1xf32> to vector<8x32x256xf32>
    %22 = arith.mulf %0, %21 : vector<8x32x256xf32>
    %c0_12 = arith.constant 0 : index
    %c0_13 = arith.constant 0 : index
    %c0_14 = arith.constant 0 : index
    %23 = vector.load %arg5[%c0_12, %c0_13, %c0_14] : memref<8x32x256xf32, #tpu.memory_space<vmem>>, vector<8x32x256xf32>
    tpu.vector_store %arg5[%c0_12, %c0_13, %c0_14], %22 {strides = array<i32>} : memref<8x32x256xf32, #tpu.memory_space<vmem>>, vector<8x32x256xf32>,
    %c0_15 = arith.constant 0 : index
    %c0_16 = arith.constant 0 : index
    %c0_17 = arith.constant 0 : index
    %24 = vector.load %arg5[%c0_15, %c0_16, %c0_17] : memref<8x32x256xf32, #tpu.memory_space<vmem>>, vector<8x32x256xf32>
    %cst_18 = arith.constant dense<0.000000e+00> : vector<8x256xf32>
    %25 = vector.multi_reduction <add>, %24, %cst_18 [1] : vector<8x32x256xf32> to vector<8x256xf32>
    %cst_19 = arith.constant 3.200000e+01 : f32
    %26 = vector.broadcast %cst_19 : f32 to vector<8x256xf32>
    %27 = arith.divf %25, %26 : vector<8x256xf32>
    %cst_20 = arith.constant dense<0xFF800000> : vector<8x256xf32>
    %28 = vector.multi_reduction <maximumf>, %24, %cst_20 [1] : vector<8x32x256xf32> to vector<8x256xf32>
    %29 = tpu.concatenate %27, %28 in 1 : vector<8x256xf32>, vector<8x256xf32> -> vector<8x512xf32>
    %30 = arith.truncf %29 : vector<8x512xf32> to vector<8x512xbf16>
    %c0_21 = arith.constant 0 : index
    %c0_22 = arith.constant 0 : index
    %31 = vector.load %arg4[%c0_21, %c0_22] : memref<512x256xbf16, #tpu.memory_space<vmem>>, vector<512x256xbf16>
    %cst_23 = arith.constant dense<0.000000e+00> : vector<8x256xf32>
    %32 = tpu.matmul %30, %31, %cst_23 {dimension_numbers = #tpu.dot_dimension_numbers<[1], [0], [0], [1], [0, 0, 1, 1], [], []>} : vector<8x512xbf16>, vector<512x256xbf16>, vector<8x256xf32> -> vector<8x256xf32>
    %33 = arith.negf %32 : vector<8x256xf32>
    %34 = math.exp %33 : vector<8x256xf32>
    %cst_24 = arith.constant 1.000000e+00 : f32
    %35 = vector.broadcast %cst_24 : f32 to vector<8x256xf32>
    %36 = arith.addf %35, %34 : vector<8x256xf32>
    %37 = arith.divf %35, %36 : vector<8x256xf32>
    %38 = vector.shape_cast %37 : vector<8x256xf32> to vector<8x1x256xf32>
    %39 = vector.broadcast %38 : vector<8x1x256xf32> to vector<8x32x256xf32>
    %40 = arith.mulf %24, %39 : vector<8x32x256xf32>
    %c0_25 = arith.constant 0 : index
    %c0_26 = arith.constant 0 : index
    %c0_27 = arith.constant 0 : index
    %41 = vector.load %arg5[%c0_25, %c0_26, %c0_27] : memref<8x32x256xf32, #tpu.memory_space<vmem>>, vector<8x32x256xf32>
    tpu.vector_store %arg5[%c0_25, %c0_26, %c0_27], %40 {strides = array<i32>} : memref<8x32x256xf32, #tpu.memory_space<vmem>>, vector<8x32x256xf32>,
    return
  }
  func.func @transform_0(%arg0: i32) -> (i32, i32, i32) {
    %c0_i32 = arith.constant 0 : i32
    %c0_i32_0 = arith.constant 0 : i32
    %c0_i32_1 = arith.constant 0 : i32
    return %arg0, %c0_i32, %c0_i32_0 : i32, i32, i32
  }
  func.func @transform_1(%arg0: i32) -> (i32, i32) {
    %c0_i32 = arith.constant 0 : i32
    %c0_i32_0 = arith.constant 0 : i32
    %c0_i32_1 = arith.constant 0 : i32
    return %c0_i32, %c0_i32_0 : i32, i32
  }
  func.func @transform_2(%arg0: i32) -> (i32, i32) {
    %c0_i32 = arith.constant 0 : i32
    %c0_i32_0 = arith.constant 0 : i32
    %c0_i32_1 = arith.constant 0 : i32
    return %c0_i32, %c0_i32_0 : i32, i32
  }
  func.func @transform_3(%arg0: i32) -> (i32, i32) {
    %c0_i32 = arith.constant 0 : i32
    %c0_i32_0 = arith.constant 0 : i32
    %c0_i32_1 = arith.constant 0 : i32
    return %c0_i32, %c0_i32_0 : i32, i32
  }
  func.func @transform_4(%arg0: i32) -> (i32, i32, i32) {
    %c0_i32 = arith.constant 0 : i32
    %c0_i32_0 = arith.constant 0 : i32
    %c0_i32_1 = arith.constant 0 : i32
    return %arg0, %c0_i32, %c0_i32_0 : i32, i32, i32
  }
}

</mosaic_0001>

<llo_original>
// kernel: dense_block_with_atten.1
$region0: #{dense_block_with_atten.1}
  #allocation0 [shape = 'u32[]', space=smem, size = 0x4, offset = 0x4, fixed_abs, tag = 'smem constant byte address 0x4 - core index']
  #allocation1 [shape = 'u32[144,128]{1,0:T(1,128)}', space=vmem, size = 0x12000, scoped, tag = 'internal scratch']
  %s0 = inlined_call_operand.vmem [shape: f32[8,32,256], index: 0, kind: input, shape index: {}]
  %s1 = inlined_call_operand.vmem [shape: f32[32,2], index: 1, kind: input, shape index: {}]
  %s2 = inlined_call_operand.vmem [shape: f32[2,32], index: 2, kind: input, shape index: {}]
  %s3 = inlined_call_operand.vmem [shape: bf16[512,256], index: 3, kind: input, shape index: {}]
  %s4 = inlined_call_operand.vmem [shape: f32[8,32,256], index: 4, kind: output, shape index: {}]
  %s5 = sld [smem:[#allocation0]]
  $region26: #{dense_block_with_atten.1} parent=0
    _
  %s7 = ssub.s32 1, %s5
  %s8 = scalar_select 0, %s7, %s5
  // Predicated region
  $region2: #{dense_block_with_atten.1} parent=0 // pred_check
    _
  $region3: #{dense_block_with_atten.1} parent=0 // pred_check_branch
    %10 = sbr.rel (0) target = $region5
  $region4: #{dense_block_with_atten.1} parent=0 // pred_region
    _
  $region5: #{dense_block_with_atten.1} parent=0 // pred_fallthru
    _
  // Predicated region
  $region6: #{dense_block_with_atten.1} parent=0 // pred_check
    _
  $region7: #{dense_block_with_atten.1} parent=0 // pred_check_branch
    %12 = sbr.rel (0) target = $region9
  $region8: #{dense_block_with_atten.1} parent=0 // pred_region
    _
  $region9: #{dense_block_with_atten.1} parent=0 // pred_fallthru
    _
  // Predicated region
  $region10: #{dense_block_with_atten.1} parent=0 // pred_check
    _
  $region11: #{dense_block_with_atten.1} parent=0 // pred_check_branch
    %14 = sbr.rel (0) target = $region13
  $region12: #{dense_block_with_atten.1} parent=0 // pred_region
    _
  $region13: #{dense_block_with_atten.1} parent=0 // pred_fallthru
    _
  // Predicated region
  $region14: #{dense_block_with_atten.1} parent=0 // pred_check
    _
  $region15: #{dense_block_with_atten.1} parent=0 // pred_check_branch
    %16 = sbr.rel (0) target = $region17
  $region16: #{dense_block_with_atten.1} parent=0 // pred_region
    _
  $region17: #{dense_block_with_atten.1} parent=0 // pred_fallthru
    _
  %v17 = vld [vmem:[%s0] sm:$0xff]
  %v18 = vld [vmem:[%s0 + $0x8] sm:$0xff]
  %v19 = vld [vmem:[%s0 + $0x10] sm:$0xff]
  %v20 = vld [vmem:[%s0 + $0x18] sm:$0xff]
  %v21 = vld [vmem:[%s0 + $0x20] sm:$0xff]
  %v22 = vld [vmem:[%s0 + $0x28] sm:$0xff]
  %v23 = vld [vmem:[%s0 + $0x30] sm:$0xff]
  %v24 = vld [vmem:[%s0 + $0x38] sm:$0xff]
  %v25 = vld [vmem:[%s0 + $0x40] sm:$0xff]
  %v26 = vld [vmem:[%s0 + $0x48] sm:$0xff]
  %v27 = vld [vmem:[%s0 + $0x50] sm:$0xff]
  %v28 = vld [vmem:[%s0 + $0x58] sm:$0xff]
  %v29 = vld [vmem:[%s0 + $0x60] sm:$0xff]
  %v30 = vld [vmem:[%s0 + $0x68] sm:$0xff]
  %v31 = vld [vmem:[%s0 + $0x70] sm:$0xff]
  %v32 = vld [vmem:[%s0 + $0x78] sm:$0xff]
  %v33 = vld [vmem:[%s0 + $0x80] sm:$0xff]
  %v34 = vld [vmem:[%s0 + $0x88] sm:$0xff]
  %v35 = vld [vmem:[%s0 + $0x90] sm:$0xff]
  %v36 = vld [vmem:[%s0 + $0x98] sm:$0xff]
  %v37 = vld [vmem:[%s0 + $0xa0] sm:$0xff]
  %v38 = vld [vmem:[%s0 + $0xa8] sm:$0xff]
  %v39 = vld [vmem:[%s0 + $0xb0] sm:$0xff]
  %v40 = vld [vmem:[%s0 + $0xb8] sm:$0xff]
  %v41 = vld [vmem:[%s0 + $0xc0] sm:$0xff]
  %v42 = vld [vmem:[%s0 + $0xc8] sm:$0xff]
  %v43 = vld [vmem:[%s0 + $0xd0] sm:$0xff]
  %v44 = vld [vmem:[%s0 + $0xd8] sm:$0xff]
  %v45 = vld [vmem:[%s0 + $0xe0] sm:$0xff]
  %v46 = vld [vmem:[%s0 + $0xe8] sm:$0xff]
  %v47 = vld [vmem:[%s0 + $0xf0] sm:$0xff]
  %v48 = vld [vmem:[%s0 + $0xf8] sm:$0xff]
  %v49 = vld [vmem:[%s0 + $0x100] sm:$0xff]
  %v50 = vld [vmem:[%s0 + $0x108] sm:$0xff]
  %v51 = vld [vmem:[%s0 + $0x110] sm:$0xff]
  %v52 = vld [vmem:[%s0 + $0x118] sm:$0xff]
  %v53 = vld [vmem:[%s0 + $0x120] sm:$0xff]
  %v54 = vld [vmem:[%s0 + $0x128] sm:$0xff]
  %v55 = vld [vmem:[%s0 + $0x130] sm:$0xff]
  %v56 = vld [vmem:[%s0 + $0x138] sm:$0xff]
  %v57 = vld [vmem:[%s0 + $0x140] sm:$0xff]
  %v58 = vld [vmem:[%s0 + $0x148] sm:$0xff]
  %v59 = vld [vmem:[%s0 + $0x150] sm:$0xff]
  %v60 = vld [vmem:[%s0 + $0x158] sm:$0xff]
  %v61 = vld [vmem:[%s0 + $0x160] sm:$0xff]
  %v62 = vld [vmem:[%s0 + $0x168] sm:$0xff]
  %v63 = vld [vmem:[%s0 + $0x170] sm:$0xff]
  %v64 = vld [vmem:[%s0 + $0x178] sm:$0xff]
  %v65 = vld [vmem:[%s0 + $0x180] sm:$0xff]
  %v66 = vld [vmem:[%s0 + $0x188] sm:$0xff]
  %v67 = vld [vmem:[%s0 + $0x190] sm:$0xff]
  %v68 = vld [vmem:[%s0 + $0x198] sm:$0xff]
  %v69 = vld [vmem:[%s0 + $0x1a0] sm:$0xff]
  %v70 = vld [vmem:[%s0 + $0x1a8] sm:$0xff]
  %v71 = vld [vmem:[%s0 + $0x1b0] sm:$0xff]
  %v72 = vld [vmem:[%s0 + $0x1b8] sm:$0xff]
  %v73 = vld [vmem:[%s0 + $0x1c0] sm:$0xff]
  %v74 = vld [vmem:[%s0 + $0x1c8] sm:$0xff]
  %v75 = vld [vmem:[%s0 + $0x1d0] sm:$0xff]
  %v76 = vld [vmem:[%s0 + $0x1d8] sm:$0xff]
  %v77 = vld [vmem:[%s0 + $0x1e0] sm:$0xff]
  %v78 = vld [vmem:[%s0 + $0x1e8] sm:$0xff]
  %v79 = vld [vmem:[%s0 + $0x1f0] sm:$0xff]
  %v80 = vld [vmem:[%s0 + $0x1f8] sm:$0xff]
  %v81 = vadd.f32 %v17, %v18
  %82 = vadd.xlane.f32.xlu0 %v81
  %v83 = vpop.xlane.xlu0 %82
  %v84 = vadd.f32 %v19, %v20
  %85 = vadd.xlane.f32.xlu0 %v84
  %v86 = vpop.xlane.xlu0 %85
  %v87 = vadd.f32 %v21, %v22
  %88 = vadd.xlane.f32.xlu0 %v87
  %v89 = vpop.xlane.xlu0 %88
  %v90 = vadd.f32 %v23, %v24
  %91 = vadd.xlane.f32.xlu0 %v90
  %v92 = vpop.xlane.xlu0 %91
  %v93 = vadd.f32 %v25, %v26
  %94 = vadd.xlane.f32.xlu0 %v93
  %v95 = vpop.xlane.xlu0 %94
  %v96 = vadd.f32 %v27, %v28
  %97 = vadd.xlane.f32.xlu0 %v96
  %v98 = vpop.xlane.xlu0 %97
  %v99 = vadd.f32 %v29, %v30
  %100 = vadd.xlane.f32.xlu0 %v99
  %v101 = vpop.xlane.xlu0 %100
  %v102 = vadd.f32 %v31, %v32
  %103 = vadd.xlane.f32.xlu0 %v102
  %v104 = vpop.xlane.xlu0 %103
  %v105 = vadd.f32 %v33, %v34
  %106 = vadd.xlane.f32.xlu0 %v105
  %v107 = vpop.xlane.xlu0 %106
  %v108 = vadd.f32 %v35, %v36
  %109 = vadd.xlane.f32.xlu0 %v108
  %v110 = vpop.xlane.xlu0 %109
  %v111 = vadd.f32 %v37, %v38
  %112 = vadd.xlane.f32.xlu0 %v111
  %v113 = vpop.xlane.xlu0 %112
  %v114 = vadd.f32 %v39, %v40
  %115 = vadd.xlane.f32.xlu0 %v114
  %v116 = vpop.xlane.xlu0 %115
  %v117 = vadd.f32 %v41, %v42
  %118 = vadd.xlane.f32.xlu0 %v117
  %v119 = vpop.xlane.xlu0 %118
  %v120 = vadd.f32 %v43, %v44
  %121 = vadd.xlane.f32.xlu0 %v120
  %v122 = vpop.xlane.xlu0 %121
  %v123 = vadd.f32 %v45, %v46
  %124 = vadd.xlane.f32.xlu0 %v123
  %v125 = vpop.xlane.xlu0 %124
  %v126 = vadd.f32 %v47, %v48
  %127 = vadd.xlane.f32.xlu0 %v126
  %v128 = vpop.xlane.xlu0 %127
  %v129 = vadd.f32 %v49, %v50
  %130 = vadd.xlane.f32.xlu0 %v129
  %v131 = vpop.xlane.xlu0 %130
  %v132 = vadd.f32 %v51, %v52
  %133 = vadd.xlane.f32.xlu0 %v132
  %v134 = vpop.xlane.xlu0 %133
  %v135 = vadd.f32 %v53, %v54
  %136 = vadd.xlane.f32.xlu0 %v135
  %v137 = vpop.xlane.xlu0 %136
  %v138 = vadd.f32 %v55, %v56
  %139 = vadd.xlane.f32.xlu0 %v138
  %v140 = vpop.xlane.xlu0 %139
  %v141 = vadd.f32 %v57, %v58
  %142 = vadd.xlane.f32.xlu0 %v141
  %v143 = vpop.xlane.xlu0 %142
  %v144 = vadd.f32 %v59, %v60
  %145 = vadd.xlane.f32.xlu0 %v144
  %v146 = vpop.xlane.xlu0 %145
  %v147 = vadd.f32 %v61, %v62
  %148 = vadd.xlane.f32.xlu0 %v147
  %v149 = vpop.xlane.xlu0 %148
  %v150 = vadd.f32 %v63, %v64
  %151 = vadd.xlane.f32.xlu0 %v150
  %v152 = vpop.xlane.xlu0 %151
  %v153 = vadd.f32 %v65, %v66
  %154 = vadd.xlane.f32.xlu0 %v153
  %v155 = vpop.xlane.xlu0 %154
  %v156 = vadd.f32 %v67, %v68
  %157 = vadd.xlane.f32.xlu0 %v156
  %v158 = vpop.xlane.xlu0 %157
  %v159 = vadd.f32 %v69, %v70
  %160 = vadd.xlane.f32.xlu0 %v159
  %v161 = vpop.xlane.xlu0 %160
  %v162 = vadd.f32 %v71, %v72
  %163 = vadd.xlane.f32.xlu0 %v162
  %v164 = vpop.xlane.xlu0 %163
  %v165 = vadd.f32 %v73, %v74
  %166 = vadd.xlane.f32.xlu0 %v165
  %v167 = vpop.xlane.xlu0 %166
  %v168 = vadd.f32 %v75, %v76
  %169 = vadd.xlane.f32.xlu0 %v168
  %v170 = vpop.xlane.xlu0 %169
  %v171 = vadd.f32 %v77, %v78
  %172 = vadd.xlane.f32.xlu0 %v171
  %v173 = vpop.xlane.xlu0 %172
  %v174 = vadd.f32 %v79, %v80
  %175 = vadd.xlane.f32.xlu0 %v174
  %v176 = vpop.xlane.xlu0 %175
  %v177 = vrcp.pop 256.0
  %v178 = vmul.f32 %v83, %v177
  %v179 = vmul.f32 %v86, %v177
  %v180 = vmul.f32 %v89, %v177
  %v181 = vmul.f32 %v92, %v177
  %v182 = vmul.f32 %v95, %v177
  %v183 = vmul.f32 %v98, %v177
  %v184 = vmul.f32 %v101, %v177
  %v185 = vmul.f32 %v104, %v177
  %v186 = vmul.f32 %v107, %v177
  %v187 = vmul.f32 %v110, %v177
  %v188 = vmul.f32 %v113, %v177
  %v189 = vmul.f32 %v116, %v177
  %v190 = vmul.f32 %v119, %v177
  %v191 = vmul.f32 %v122, %v177
  %v192 = vmul.f32 %v125, %v177
  %v193 = vmul.f32 %v128, %v177
  %v194 = vmul.f32 %v131, %v177
  %v195 = vmul.f32 %v134, %v177
  %v196 = vmul.f32 %v137, %v177
  %v197 = vmul.f32 %v140, %v177
  %v198 = vmul.f32 %v143, %v177
  %v199 = vmul.f32 %v146, %v177
  %v200 = vmul.f32 %v149, %v177
  %v201 = vmul.f32 %v152, %v177
  %v202 = vmul.f32 %v155, %v177
  %v203 = vmul.f32 %v158, %v177
  %v204 = vmul.f32 %v161, %v177
  %v205 = vmul.f32 %v164, %v177
  %v206 = vmul.f32 %v167, %v177
  %v207 = vmul.f32 %v170, %v177
  %v208 = vmul.f32 %v173, %v177
  %v209 = vmul.f32 %v176, %v177
  %v210 = vmax.f32 %v17, %v18
  %211 = vmax.xlane.f32.xlu0 %v210
  %v212 = vpop.xlane.xlu0 %211
  %v213 = vmax.f32 %v19, %v20
  %214 = vmax.xlane.f32.xlu0 %v213
  %v215 = vpop.xlane.xlu0 %214
  %v216 = vmax.f32 %v21, %v22
  %217 = vmax.xlane.f32.xlu0 %v216
  %v218 = vpop.xlane.xlu0 %217
  %v219 = vmax.f32 %v23, %v24
  %220 = vmax.xlane.f32.xlu0 %v219
  %v221 = vpop.xlane.xlu0 %220
  %v222 = vmax.f32 %v25, %v26
  %223 = vmax.xlane.f32.xlu0 %v222
  %v224 = vpop.xlane.xlu0 %223
  %v225 = vmax.f32 %v27, %v28
  %226 = vmax.xlane.f32.xlu0 %v225
  %v227 = vpop.xlane.xlu0 %226
  %v228 = vmax.f32 %v29, %v30
  %229 = vmax.xlane.f32.xlu0 %v228
  %v230 = vpop.xlane.xlu0 %229
  %v231 = vmax.f32 %v31, %v32
  %232 = vmax.xlane.f32.xlu0 %v231
  %v233 = vpop.xlane.xlu0 %232
  %v234 = vmax.f32 %v33, %v34
  %235 = vmax.xlane.f32.xlu0 %v234
  %v236 = vpop.xlane.xlu0 %235
  %v237 = vmax.f32 %v35, %v36
  %238 = vmax.xlane.f32.xlu0 %v237
  %v239 = vpop.xlane.xlu0 %238
  %v240 = vmax.f32 %v37, %v38
  %241 = vmax.xlane.f32.xlu0 %v240
  %v242 = vpop.xlane.xlu0 %241
  %v243 = vmax.f32 %v39, %v40
  %244 = vmax.xlane.f32.xlu0 %v243
  %v245 = vpop.xlane.xlu0 %244
  %v246 = vmax.f32 %v41, %v42
  %247 = vmax.xlane.f32.xlu0 %v246
  %v248 = vpop.xlane.xlu0 %247
  %v249 = vmax.f32 %v43, %v44
  %250 = vmax.xlane.f32.xlu0 %v249
  %v251 = vpop.xlane.xlu0 %250
  %v252 = vmax.f32 %v45, %v46
  %253 = vmax.xlane.f32.xlu0 %v252
  %v254 = vpop.xlane.xlu0 %253
  %v255 = vmax.f32 %v47, %v48
  %256 = vmax.xlane.f32.xlu0 %v255
  %v257 = vpop.xlane.xlu0 %256
  %v258 = vmax.f32 %v49, %v50
  %259 = vmax.xlane.f32.xlu0 %v258
  %v260 = vpop.xlane.xlu0 %259
  %v261 = vmax.f32 %v51, %v52
  %262 = vmax.xlane.f32.xlu0 %v261
  %v263 = vpop.xlane.xlu0 %262
  %v264 = vmax.f32 %v53, %v54
  %265 = vmax.xlane.f32.xlu0 %v264
  %v266 = vpop.xlane.xlu0 %265
  %v267 = vmax.f32 %v55, %v56
  %268 = vmax.xlane.f32.xlu0 %v267
  %v269 = vpop.xlane.xlu0 %268
  %v270 = vmax.f32 %v57, %v58
  %271 = vmax.xlane.f32.xlu0 %v270
  %v272 = vpop.xlane.xlu0 %271
  %v273 = vmax.f32 %v59, %v60
  %274 = vmax.xlane.f32.xlu0 %v273
  %v275 = vpop.xlane.xlu0 %274
  %v276 = vmax.f32 %v61, %v62
  %277 = vmax.xlane.f32.xlu0 %v276
  %v278 = vpop.xlane.xlu0 %277
  %v279 = vmax.f32 %v63, %v64
  %280 = vmax.xlane.f32.xlu0 %v279
  %v281 = vpop.xlane.xlu0 %280
  %v282 = vmax.f32 %v65, %v66
  %283 = vmax.xlane.f32.xlu0 %v282
  %v284 = vpop.xlane.xlu0 %283
  %v285 = vmax.f32 %v67, %v68
  %286 = vmax.xlane.f32.xlu0 %v285
  %v287 = vpop.xlane.xlu0 %286
  %v288 = vmax.f32 %v69, %v70
  %289 = vmax.xlane.f32.xlu0 %v288
  %v290 = vpop.xlane.xlu0 %289
  %v291 = vmax.f32 %v71, %v72
  %292 = vmax.xlane.f32.xlu0 %v291
  %v293 = vpop.xlane.xlu0 %292
  %v294 = vmax.f32 %v73, %v74
  %295 = vmax.xlane.f32.xlu0 %v294
  %v296 = vpop.xlane.xlu0 %295
  %v297 = vmax.f32 %v75, %v76
  %298 = vmax.xlane.f32.xlu0 %v297
  %v299 = vpop.xlane.xlu0 %298
  %v300 = vmax.f32 %v77, %v78
  %301 = vmax.xlane.f32.xlu0 %v300
  %v302 = vpop.xlane.xlu0 %301
  %v303 = vmax.f32 %v79, %v80
  %304 = vmax.xlane.f32.xlu0 %v303
  %v305 = vpop.xlane.xlu0 %304
  %v338 = vlaneseq
  %v339 = vand.u32 %v338, 127
  %v340 = vlaneseq
  %v341 = vshrl.u32 %v340, 7
  %v342 = vsub.s32 %v339, %v341
  %v343 = vrot.slane %v178, %v342
  %v344 = vadd.s32 %v339, 4294967288
  %v345 = vlaneseq
  %v346 = vshrl.u32 %v345, 7
  %v347 = vsub.s32 %v344, %v346
  %v348 = vrot.slane %v179, %v347
  %vm349 = vcmask 130112
  %v350 = vsel %vm349, %v348, %v343
  %v351 = vadd.s32 %v339, 4294967280
  %v352 = vlaneseq
  %v353 = vshrl.u32 %v352, 7
  %v354 = vsub.s32 %v351, %v353
  %v355 = vrot.slane %v180, %v354
  %vm356 = vcmask 195712
  %v357 = vsel %vm356, %v355, %v350
  %v358 = vadd.s32 %v339, 4294967272
  %v359 = vlaneseq
  %v360 = vshrl.u32 %v359, 7
  %v361 = vsub.s32 %v358, %v360
  %v362 = vrot.slane %v181, %v361
  %vm363 = vcmask 261312
  %v364 = vsel %vm363, %v362, %v357
  %v365 = vlaneseq
  %v366 = vshrl.u32 %v365, 7
  %v367 = vsub.s32 %v339, %v366
  %v368 = vrot.slane %v182, %v367
  %v369 = vlaneseq
  %v370 = vshrl.u32 %v369, 7
  %v371 = vsub.s32 %v344, %v370
  %v372 = vrot.slane %v183, %v371
  %v373 = vsel %vm349, %v372, %v368
  %v374 = vlaneseq
  %v375 = vshrl.u32 %v374, 7
  %v376 = vsub.s32 %v351, %v375
  %v377 = vrot.slane %v184, %v376
  %v378 = vsel %vm356, %v377, %v373
  %v379 = vlaneseq
  %v380 = vshrl.u32 %v379, 7
  %v381 = vsub.s32 %v358, %v380
  %v382 = vrot.slane %v185, %v381
  %v383 = vsel %vm363, %v382, %v378
  %v384 = vlaneseq
  %v385 = vshrl.u32 %v384, 7
  %v386 = vsub.s32 %v339, %v385
  %v387 = vrot.slane %v186, %v386
  %v388 = vlaneseq
  %v389 = vshrl.u32 %v388, 7
  %v390 = vsub.s32 %v344, %v389
  %v391 = vrot.slane %v187, %v390
  %v392 = vsel %vm349, %v391, %v387
  %v393 = vlaneseq
  %v394 = vshrl.u32 %v393, 7
  %v395 = vsub.s32 %v351, %v394
  %v396 = vrot.slane %v188, %v395
  %v397 = vsel %vm356, %v396, %v392
  %v398 = vlaneseq
  %v399 = vshrl.u32 %v398, 7
  %v400 = vsub.s32 %v358, %v399
  %v401 = vrot.slane %v189, %v400
  %v402 = vsel %vm363, %v401, %v397
  %v403 = vlaneseq
  %v404 = vshrl.u32 %v403, 7
  %v405 = vsub.s32 %v339, %v404
  %v406 = vrot.slane %v190, %v405
  %v407 = vlaneseq
  %v408 = vshrl.u32 %v407, 7
  %v409 = vsub.s32 %v344, %v408
  %v410 = vrot.slane %v191, %v409
  %v411 = vsel %vm349, %v410, %v406
  %v412 = vlaneseq
  %v413 = vshrl.u32 %v412, 7
  %v414 = vsub.s32 %v351, %v413
  %v415 = vrot.slane %v192, %v414
  %v416 = vsel %vm356, %v415, %v411
  %v417 = vlaneseq
  %v418 = vshrl.u32 %v417, 7
  %v419 = vsub.s32 %v358, %v418
  %v420 = vrot.slane %v193, %v419
  %v421 = vsel %vm363, %v420, %v416
  %v422 = vlaneseq
  %v423 = vshrl.u32 %v422, 7
  %v424 = vsub.s32 %v339, %v423
  %v425 = vrot.slane %v194, %v424
  %v426 = vlaneseq
  %v427 = vshrl.u32 %v426, 7
  %v428 = vsub.s32 %v344, %v427
  %v429 = vrot.slane %v195, %v428
  %v430 = vsel %vm349, %v429, %v425
  %v431 = vlaneseq
  %v432 = vshrl.u32 %v431, 7
  %v433 = vsub.s32 %v351, %v432
  %v434 = vrot.slane %v196, %v433
  %v435 = vsel %vm356, %v434, %v430
  %v436 = vlaneseq
  %v437 = vshrl.u32 %v436, 7
  %v438 = vsub.s32 %v358, %v437
  %v439 = vrot.slane %v197, %v438
  %v440 = vsel %vm363, %v439, %v435
  %v441 = vlaneseq
  %v442 = vshrl.u32 %v441, 7
  %v443 = vsub.s32 %v339, %v442
  %v444 = vrot.slane %v198, %v443
  %v445 = vlaneseq
  %v446 = vshrl.u32 %v445, 7
  %v447 = vsub.s32 %v344, %v446
  %v448 = vrot.slane %v199, %v447
  %v449 = vsel %vm349, %v448, %v444
  %v450 = vlaneseq
  %v451 = vshrl.u32 %v450, 7
  %v452 = vsub.s32 %v351, %v451
  %v453 = vrot.slane %v200, %v452
  %v454 = vsel %vm356, %v453, %v449
  %v455 = vlaneseq
  %v456 = vshrl.u32 %v455, 7
  %v457 = vsub.s32 %v358, %v456
  %v458 = vrot.slane %v201, %v457
  %v459 = vsel %vm363, %v458, %v454
  %v460 = vlaneseq
  %v461 = vshrl.u32 %v460, 7
  %v462 = vsub.s32 %v339, %v461
  %v463 = vrot.slane %v202, %v462
  %v464 = vlaneseq
  %v465 = vshrl.u32 %v464, 7
  %v466 = vsub.s32 %v344, %v465
  %v467 = vrot.slane %v203, %v466
  %v468 = vsel %vm349, %v467, %v463
  %v469 = vlaneseq
  %v470 = vshrl.u32 %v469, 7
  %v471 = vsub.s32 %v351, %v470
  %v472 = vrot.slane %v204, %v471
  %v473 = vsel %vm356, %v472, %v468
  %v474 = vlaneseq
  %v475 = vshrl.u32 %v474, 7
  %v476 = vsub.s32 %v358, %v475
  %v477 = vrot.slane %v205, %v476
  %v478 = vsel %vm363, %v477, %v473
  %v479 = vlaneseq
  %v480 = vshrl.u32 %v479, 7
  %v481 = vsub.s32 %v339, %v480
  %v482 = vrot.slane %v206, %v481
  %v483 = vlaneseq
  %v484 = vshrl.u32 %v483, 7
  %v485 = vsub.s32 %v344, %v484
  %v486 = vrot.slane %v207, %v485
  %v487 = vsel %vm349, %v486, %v482
  %v488 = vlaneseq
  %v489 = vshrl.u32 %v488, 7
  %v490 = vsub.s32 %v351, %v489
  %v491 = vrot.slane %v208, %v490
  %v492 = vsel %vm356, %v491, %v487
  %v493 = vlaneseq
  %v494 = vshrl.u32 %v493, 7
  %v495 = vsub.s32 %v358, %v494
  %v496 = vrot.slane %v209, %v495
  %v497 = vsel %vm363, %v496, %v492
  %vm498 = vcmask 1041409
  %v499 = vsel %vm498, %v383, %v364
  %vm500 = vcmask 1042434
  %v501 = vsel %vm500, %v402, %v499
  %vm502 = vcmask 1043459
  %v503 = vsel %vm502, %v421, %v501
  %vm504 = vcmask 1044484
  %v505 = vsel %vm504, %v440, %v503
  %vm506 = vcmask 1045509
  %v507 = vsel %vm506, %v459, %v505
  %vm508 = vcmask 1046534
  %v509 = vsel %vm508, %v478, %v507
  %vm510 = vcmask 1047559
  %v511 = vsel %vm510, %v497, %v509
  %v544 = vlaneseq
  %v545 = vshrl.u32 %v544, 7
  %v546 = vsub.s32 %v339, %v545
  %v547 = vrot.slane %v212, %v546
  %v548 = vlaneseq
  %v549 = vshrl.u32 %v548, 7
  %v550 = vsub.s32 %v344, %v549
  %v551 = vrot.slane %v215, %v550
  %v552 = vsel %vm349, %v551, %v547
  %v553 = vlaneseq
  %v554 = vshrl.u32 %v553, 7
  %v555 = vsub.s32 %v351, %v554
  %v556 = vrot.slane %v218, %v555
  %v557 = vsel %vm356, %v556, %v552
  %v558 = vlaneseq
  %v559 = vshrl.u32 %v558, 7
  %v560 = vsub.s32 %v358, %v559
  %v561 = vrot.slane %v221, %v560
  %v562 = vsel %vm363, %v561, %v557
  %v563 = vlaneseq
  %v564 = vshrl.u32 %v563, 7
  %v565 = vsub.s32 %v339, %v564
  %v566 = vrot.slane %v224, %v565
  %v567 = vlaneseq
  %v568 = vshrl.u32 %v567, 7
  %v569 = vsub.s32 %v344, %v568
  %v570 = vrot.slane %v227, %v569
  %v571 = vsel %vm349, %v570, %v566
  %v572 = vlaneseq
  %v573 = vshrl.u32 %v572, 7
  %v574 = vsub.s32 %v351, %v573
  %v575 = vrot.slane %v230, %v574
  %v576 = vsel %vm356, %v575, %v571
  %v577 = vlaneseq
  %v578 = vshrl.u32 %v577, 7
  %v579 = vsub.s32 %v358, %v578
  %v580 = vrot.slane %v233, %v579
  %v581 = vsel %vm363, %v580, %v576
  %v582 = vlaneseq
  %v583 = vshrl.u32 %v582, 7
  %v584 = vsub.s32 %v339, %v583
  %v585 = vrot.slane %v236, %v584
  %v586 = vlaneseq
  %v587 = vshrl.u32 %v586, 7
  %v588 = vsub.s32 %v344, %v587
  %v589 = vrot.slane %v239, %v588
  %v590 = vsel %vm349, %v589, %v585
  %v591 = vlaneseq
  %v592 = vshrl.u32 %v591, 7
  %v593 = vsub.s32 %v351, %v592
  %v594 = vrot.slane %v242, %v593
  %v595 = vsel %vm356, %v594, %v590
  %v596 = vlaneseq
  %v597 = vshrl.u32 %v596, 7
  %v598 = vsub.s32 %v358, %v597
  %v599 = vrot.slane %v245, %v598
  %v600 = vsel %vm363, %v599, %v595
  %v601 = vlaneseq
  %v602 = vshrl.u32 %v601, 7
  %v603 = vsub.s32 %v339, %v602
  %v604 = vrot.slane %v248, %v603
  %v605 = vlaneseq
  %v606 = vshrl.u32 %v605, 7
  %v607 = vsub.s32 %v344, %v606
  %v608 = vrot.slane %v251, %v607
  %v609 = vsel %vm349, %v608, %v604
  %v610 = vlaneseq
  %v611 = vshrl.u32 %v610, 7
  %v612 = vsub.s32 %v351, %v611
  %v613 = vrot.slane %v254, %v612
  %v614 = vsel %vm356, %v613, %v609
  %v615 = vlaneseq
  %v616 = vshrl.u32 %v615, 7
  %v617 = vsub.s32 %v358, %v616
  %v618 = vrot.slane %v257, %v617
  %v619 = vsel %vm363, %v618, %v614
  %v620 = vlaneseq
  %v621 = vshrl.u32 %v620, 7
  %v622 = vsub.s32 %v339, %v621
  %v623 = vrot.slane %v260, %v622
  %v624 = vlaneseq
  %v625 = vshrl.u32 %v624, 7
  %v626 = vsub.s32 %v344, %v625
  %v627 = vrot.slane %v263, %v626
  %v628 = vsel %vm349, %v627, %v623
  %v629 = vlaneseq
  %v630 = vshrl.u32 %v629, 7
  %v631 = vsub.s32 %v351, %v630
  %v632 = vrot.slane %v266, %v631
  %v633 = vsel %vm356, %v632, %v628
  %v634 = vlaneseq
  %v635 = vshrl.u32 %v634, 7
  %v636 = vsub.s32 %v358, %v635
  %v637 = vrot.slane %v269, %v636
  %v638 = vsel %vm363, %v637, %v633
  %v639 = vlaneseq
  %v640 = vshrl.u32 %v639, 7
  %v641 = vsub.s32 %v339, %v640
  %v642 = vrot.slane %v272, %v641
  %v643 = vlaneseq
  %v644 = vshrl.u32 %v643, 7
  %v645 = vsub.s32 %v344, %v644
  %v646 = vrot.slane %v275, %v645
  %v647 = vsel %vm349, %v646, %v642
  %v648 = vlaneseq
  %v649 = vshrl.u32 %v648, 7
  %v650 = vsub.s32 %v351, %v649
  %v651 = vrot.slane %v278, %v650
  %v652 = vsel %vm356, %v651, %v647
  %v653 = vlaneseq
  %v654 = vshrl.u32 %v653, 7
  %v655 = vsub.s32 %v358, %v654
  %v656 = vrot.slane %v281, %v655
  %v657 = vsel %vm363, %v656, %v652
  %v658 = vlaneseq
  %v659 = vshrl.u32 %v658, 7
  %v660 = vsub.s32 %v339, %v659
  %v661 = vrot.slane %v284, %v660
  %v662 = vlaneseq
  %v663 = vshrl.u32 %v662, 7
  %v664 = vsub.s32 %v344, %v663
  %v665 = vrot.slane %v287, %v664
  %v666 = vsel %vm349, %v665, %v661
  %v667 = vlaneseq
  %v668 = vshrl.u32 %v667, 7
  %v669 = vsub.s32 %v351, %v668
  %v670 = vrot.slane %v290, %v669
  %v671 = vsel %vm356, %v670, %v666
  %v672 = vlaneseq
  %v673 = vshrl.u32 %v672, 7
  %v674 = vsub.s32 %v358, %v673
  %v675 = vrot.slane %v293, %v674
  %v676 = vsel %vm363, %v675, %v671
  %v677 = vlaneseq
  %v678 = vshrl.u32 %v677, 7
  %v679 = vsub.s32 %v339, %v678
  %v680 = vrot.slane %v296, %v679
  %v681 = vlaneseq
  %v682 = vshrl.u32 %v681, 7
  %v683 = vsub.s32 %v344, %v682
  %v684 = vrot.slane %v299, %v683
  %v685 = vsel %vm349, %v684, %v680
  %v686 = vlaneseq
  %v687 = vshrl.u32 %v686, 7
  %v688 = vsub.s32 %v351, %v687
  %v689 = vrot.slane %v302, %v688
  %v690 = vsel %vm356, %v689, %v685
  %v691 = vlaneseq
  %v692 = vshrl.u32 %v691, 7
  %v693 = vsub.s32 %v358, %v692
  %v694 = vrot.slane %v305, %v693
  %v695 = vsel %vm363, %v694, %v690
  %v696 = vsel %vm498, %v581, %v562
  %v697 = vsel %vm500, %v600, %v696
  %v698 = vsel %vm502, %v619, %v697
  %v699 = vsel %vm504, %v638, %v698
  %v700 = vsel %vm506, %v657, %v699
  %v701 = vsel %vm508, %v676, %v700
  %v702 = vsel %vm510, %v695, %v701
  %v703 = vld [vmem:[%s1] sm:$0xff]
  %v704 = vld [vmem:[%s1 + $0x8] sm:$0xff]
  %v705 = vld [vmem:[%s1 + $0x10] sm:$0xff]
  %v706 = vld [vmem:[%s1 + $0x18] sm:$0xff]
  %vm707 = vcmask 261120
  %v708 = vsel %vm707, %v511, 0
  %v710 = vsel %vm707, %v702, 0
  %712 = vmatprep.subr.mxu0 0.0
  %713 = vmatpush1.msra.mxu0 %v703
  %714 = vmatprep.subr.mxu0 0.0
  %715 = vmatpush1.msra.mxu0 %v704
  %716 = vmatprep.subr.mxu0 0.0
  %717 = vmatpush1.msra.mxu0 %v705
  %718 = vmatprep.subr.mxu0 0.0
  %719 = vmatpush1.msra.mxu0 %v706
  %720 = vmatprep.subr.mxu0 0.0
  %721 = vmatpush1.msra.mxu0 0.0
  %722 = vmatprep.subr.mxu0 0.0
  %723 = vmatpush1.msra.mxu0 0.0
  %724 = vmatprep.subr.mxu0 0.0
  %725 = vmatpush1.msra.mxu0 0.0
  %726 = vmatprep.subr.mxu0 0.0
  %727 = vmatpush1.msra.mxu0 0.0
  %728 = vmatprep.subr.mxu0 0.0
  %729 = vmatpush1.msra.mxu0 0.0
  %730 = vmatprep.subr.mxu0 0.0
  %731 = vmatpush1.msra.mxu0 0.0
  %732 = vmatprep.subr.mxu0 0.0
  %733 = vmatpush1.msra.mxu0 0.0
  %734 = vmatprep.subr.mxu0 0.0
  %735 = vmatpush1.msra.mxu0 0.0
  %736 = vmatprep.subr.mxu0 0.0
  %737 = vmatpush1.msra.mxu0 0.0
  %738 = vmatprep.subr.mxu0 0.0
  %739 = vmatpush1.msra.mxu0 0.0
  %740 = vmatprep.subr.mxu0 0.0
  %741 = vmatpush1.msra.mxu0 0.0
  %742 = vmatprep.subr.mxu0 0.0
  %743 = vmatpush1.msra.mxu0 0.0
  %744 = vmatprep.subr.mxu0 0.0
  %745 = vmatpush1.msra.mxu0 0.0
  %746 = vmatprep.subr.mxu0 0.0
  %747 = vmatpush1.msra.mxu0 0.0
  %748 = vmatprep.subr.mxu0 0.0
  %749 = vmatpush1.msra.mxu0 0.0
  %750 = vmatprep.subr.mxu0 0.0
  %751 = vmatpush1.msra.mxu0 0.0
  %752 = vmatprep.subr.mxu0 0.0
  %753 = vmatpush1.msra.mxu0 0.0
  %754 = vmatprep.subr.mxu0 0.0
  %755 = vmatpush1.msra.mxu0 0.0
  %756 = vmatprep.subr.mxu0 0.0
  %757 = vmatpush1.msra.mxu0 0.0
  %758 = vmatprep.subr.mxu0 0.0
  %759 = vmatpush1.msra.mxu0 0.0
  %760 = vmatprep.subr.mxu0 0.0
  %761 = vmatpush1.msra.mxu0 0.0
  %762 = vmatprep.subr.mxu0 0.0
  %763 = vmatpush1.msra.mxu0 0.0
  %764 = vmatprep.subr.mxu0 0.0
  %765 = vmatpush1.msra.mxu0 0.0
  %766 = vmatprep.subr.mxu0 0.0
  %767 = vmatpush1.msra.mxu0 0.0
  %768 = vmatprep.subr.mxu0 0.0
  %769 = vmatpush1.msra.mxu0 0.0
  %770 = vmatprep.subr.mxu0 0.0
  %771 = vmatpush1.msra.mxu0 0.0
  %772 = vmatprep.subr.mxu0 0.0
  %773 = vmatpush1.msra.mxu0 0.0
  %774 = vmatprep.subr.mxu0 0.0
  %775 = vmatpush1.msra.mxu0 0.0
  %776 = vmatprep.mubr.f32.mxu0 0.0
  %777 = vmatmul.mubr.f32.gmra.mrb[0].mxu0 %v708
  %v778 = vpop.f32.mrb[0].mxu0
  %v779 = vadd.f32 0.0, %v778
  %v780 = vpop.f32.mrb[0].mxu0
  %781 = vmatprep.mubr.f32.mxu0 0.0
  %782 = vmatmul.mubr.f32.gmra.mrb[0].mxu0 %v710
  %v783 = vpop.f32.mrb[0].mxu0
  %v784 = vadd.f32 0.0, %v783
  %v785 = vpop.f32.mrb[0].mxu0
  %786 = vdwg.mxu0
  %v787 = vmax.f32 %v779, 0.0
  %v788 = vmax.f32 %v784, 0.0
  %v789 = vld [vmem:[%s2] sm:$0x3]
  %vm790 = vcmask 15360
  %v792 = vsel %vm790, %v787, 0
  %v795 = vsel %vm790, %v788, 0
  %vm797 = vcmask 1041408
  %v799 = vsel %vm797, %v789, 0
  %801 = vmatprep.subr.mxu0 0.0
  %802 = vmatpush1.msra.mxu0 %v799
  %803 = vmatprep.subr.mxu0 0.0
  %804 = vmatpush1.msra.mxu0 0.0
  %805 = vmatprep.subr.mxu0 0.0
  %806 = vmatpush1.msra.mxu0 0.0
  %807 = vmatprep.subr.mxu0 0.0
  %808 = vmatpush1.msra.mxu0 0.0
  %809 = vmatprep.subr.mxu0 0.0
  %810 = vmatpush1.msra.mxu0 0.0
  %811 = vmatprep.subr.mxu0 0.0
  %812 = vmatpush1.msra.mxu0 0.0
  %813 = vmatprep.subr.mxu0 0.0
  %814 = vmatpush1.msra.mxu0 0.0
  %815 = vmatprep.subr.mxu0 0.0
  %816 = vmatpush1.msra.mxu0 0.0
  %817 = vmatprep.subr.mxu0 0.0
  %818 = vmatpush1.msra.mxu0 0.0
  %819 = vmatprep.subr.mxu0 0.0
  %820 = vmatpush1.msra.mxu0 0.0
  %821 = vmatprep.subr.mxu0 0.0
  %822 = vmatpush1.msra.mxu0 0.0
  %823 = vmatprep.subr.mxu0 0.0
  %824 = vmatpush1.msra.mxu0 0.0
  %825 = vmatprep.subr.mxu0 0.0
  %826 = vmatpush1.msra.mxu0 0.0
  %827 = vmatprep.subr.mxu0 0.0
  %828 = vmatpush1.msra.mxu0 0.0
  %829 = vmatprep.subr.mxu0 0.0
  %830 = vmatpush1.msra.mxu0 0.0
  %831 = vmatprep.subr.mxu0 0.0
  %832 = vmatpush1.msra.mxu0 0.0
  %833 = vmatprep.subr.mxu0 0.0
  %834 = vmatpush1.msra.mxu0 0.0
  %835 = vmatprep.subr.mxu0 0.0
  %836 = vmatpush1.msra.mxu0 0.0
  %837 = vmatprep.subr.mxu0 0.0
  %838 = vmatpush1.msra.mxu0 0.0
  %839 = vmatprep.subr.mxu0 0.0
  %840 = vmatpush1.msra.mxu0 0.0
  %841 = vmatprep.subr.mxu0 0.0
  %842 = vmatpush1.msra.mxu0 0.0
  %843 = vmatprep.subr.mxu0 0.0
  %844 = vmatpush1.msra.mxu0 0.0
  %845 = vmatprep.subr.mxu0 0.0
  %846 = vmatpush1.msra.mxu0 0.0
  %847 = vmatprep.subr.mxu0 0.0
  %848 = vmatpush1.msra.mxu0 0.0
  %849 = vmatprep.subr.mxu0 0.0
  %850 = vmatpush1.msra.mxu0 0.0
  %851 = vmatprep.subr.mxu0 0.0
  %852 = vmatpush1.msra.mxu0 0.0
  %853 = vmatprep.subr.mxu0 0.0
  %854 = vmatpush1.msra.mxu0 0.0
  %855 = vmatprep.subr.mxu0 0.0
  %856 = vmatpush1.msra.mxu0 0.0
  %857 = vmatprep.subr.mxu0 0.0
  %858 = vmatpush1.msra.mxu0 0.0
  %859 = vmatprep.subr.mxu0 0.0
  %860 = vmatpush1.msra.mxu0 0.0
  %861 = vmatprep.subr.mxu0 0.0
  %862 = vmatpush1.msra.mxu0 0.0
  %863 = vmatprep.subr.mxu0 0.0
  %864 = vmatpush1.msra.mxu0 0.0
  %865 = vmatprep.mubr.f32.mxu0 0.0
  %866 = vmatmul.mubr.f32.gmra.mrb[0].mxu0 %v792
  %v867 = vpop.f32.mrb[0].mxu0
  %v868 = vadd.f32 0.0, %v867
  %v869 = vpop.f32.mrb[0].mxu0
  %870 = vmatprep.mubr.f32.mxu0 0.0
  %871 = vmatmul.mubr.f32.gmra.mrb[0].mxu0 %v795
  %v872 = vpop.f32.mrb[0].mxu0
  %v873 = vadd.f32 0.0, %v872
  %v874 = vpop.f32.mrb[0].mxu0
  %875 = vdwg.mxu0
  %v876 = vadd.f32 %v868, %v873
  %v877 = vxor.u32 %v876, 2147483648
  %v878 = vmul.f32 %v877, 1.442695
  %v879 = vpow.pop %v878
  %v880 = vadd.f32 %v879, 1.0
  %v881 = vrcp.pop %v880
  %v882 = vmul.f32 1.0, %v881
  %v883 = vlaneseq
  %v884 = vshrl.u32 %v883, 7
  %v885 = vsub.s32 0, %v884
  %v886 = vrot.slane %v882, %v885
  %888 = vbcast.lane.b32.xlu0 %v886, 256
  %v889 = vpop.permute.xlu0 %888
  %s891 = sor.u32 256, 8
  %892 = vbcast.lane.b32.xlu0 %v886, %s891
  %v893 = vpop.permute.xlu0 %892
  %s895 = sor.u32 256, 16
  %896 = vbcast.lane.b32.xlu0 %v886, %s895
  %v897 = vpop.permute.xlu0 %896
  %s899 = sor.u32 256, 24
  %900 = vbcast.lane.b32.xlu0 %v886, %s899
  %v901 = vpop.permute.xlu0 %900
  %v902 = vlaneseq
  %v903 = vshrl.u32 %v902, 7
  %v904 = vsub.s32 1, %v903
  %v905 = vrot.slane %v882, %v904
  %907 = vbcast.lane.b32.xlu0 %v905, 256
  %v908 = vpop.permute.xlu0 %907
  %s910 = sor.u32 256, 8
  %911 = vbcast.lane.b32.xlu0 %v905, %s910
  %v912 = vpop.permute.xlu0 %911
  %s914 = sor.u32 256, 16
  %915 = vbcast.lane.b32.xlu0 %v905, %s914
  %v916 = vpop.permute.xlu0 %915
  %s918 = sor.u32 256, 24
  %919 = vbcast.lane.b32.xlu0 %v905, %s918
  %v920 = vpop.permute.xlu0 %919
  %v921 = vlaneseq
  %v922 = vshrl.u32 %v921, 7
  %v923 = vsub.s32 2, %v922
  %v924 = vrot.slane %v882, %v923
  %926 = vbcast.lane.b32.xlu0 %v924, 256
  %v927 = vpop.permute.xlu0 %926
  %s929 = sor.u32 256, 8
  %930 = vbcast.lane.b32.xlu0 %v924, %s929
  %v931 = vpop.permute.xlu0 %930
  %s933 = sor.u32 256, 16
  %934 = vbcast.lane.b32.xlu0 %v924, %s933
  %v935 = vpop.permute.xlu0 %934
  %s937 = sor.u32 256, 24
  %938 = vbcast.lane.b32.xlu0 %v924, %s937
  %v939 = vpop.permute.xlu0 %938
  %v940 = vlaneseq
  %v941 = vshrl.u32 %v940, 7
  %v942 = vsub.s32 3, %v941
  %v943 = vrot.slane %v882, %v942
  %945 = vbcast.lane.b32.xlu0 %v943, 256
  %v946 = vpop.permute.xlu0 %945
  %s948 = sor.u32 256, 8
  %949 = vbcast.lane.b32.xlu0 %v943, %s948
  %v950 = vpop.permute.xlu0 %949
  %s952 = sor.u32 256, 16
  %953 = vbcast.lane.b32.xlu0 %v943, %s952
  %v954 = vpop.permute.xlu0 %953
  %s956 = sor.u32 256, 24
  %957 = vbcast.lane.b32.xlu0 %v943, %s956
  %v958 = vpop.permute.xlu0 %957
  %v959 = vlaneseq
  %v960 = vshrl.u32 %v959, 7
  %v961 = vsub.s32 4, %v960
  %v962 = vrot.slane %v882, %v961
  %964 = vbcast.lane.b32.xlu0 %v962, 256
  %v965 = vpop.permute.xlu0 %964
  %s967 = sor.u32 256, 8
  %968 = vbcast.lane.b32.xlu0 %v962, %s967
  %v969 = vpop.permute.xlu0 %968
  %s971 = sor.u32 256, 16
  %972 = vbcast.lane.b32.xlu0 %v962, %s971
  %v973 = vpop.permute.xlu0 %972
  %s975 = sor.u32 256, 24
  %976 = vbcast.lane.b32.xlu0 %v962, %s975
  %v977 = vpop.permute.xlu0 %976
  %v978 = vlaneseq
  %v979 = vshrl.u32 %v978, 7
  %v980 = vsub.s32 5, %v979
  %v981 = vrot.slane %v882, %v980
  %983 = vbcast.lane.b32.xlu0 %v981, 256
  %v984 = vpop.permute.xlu0 %983
  %s986 = sor.u32 256, 8
  %987 = vbcast.lane.b32.xlu0 %v981, %s986
  %v988 = vpop.permute.xlu0 %987
  %s990 = sor.u32 256, 16
  %991 = vbcast.lane.b32.xlu0 %v981, %s990
  %v992 = vpop.permute.xlu0 %991
  %s994 = sor.u32 256, 24
  %995 = vbcast.lane.b32.xlu0 %v981, %s994
  %v996 = vpop.permute.xlu0 %995
  %v997 = vlaneseq
  %v998 = vshrl.u32 %v997, 7
  %v999 = vsub.s32 6, %v998
  %v1000 = vrot.slane %v882, %v999
  %1002 = vbcast.lane.b32.xlu0 %v1000, 256
  %v1003 = vpop.permute.xlu0 %1002
  %s1005 = sor.u32 256, 8
  %1006 = vbcast.lane.b32.xlu0 %v1000, %s1005
  %v1007 = vpop.permute.xlu0 %1006
  %s1009 = sor.u32 256, 16
  %1010 = vbcast.lane.b32.xlu0 %v1000, %s1009
  %v1011 = vpop.permute.xlu0 %1010
  %s1013 = sor.u32 256, 24
  %1014 = vbcast.lane.b32.xlu0 %v1000, %s1013
  %v1015 = vpop.permute.xlu0 %1014
  %v1016 = vlaneseq
  %v1017 = vshrl.u32 %v1016, 7
  %v1018 = vsub.s32 7, %v1017
  %v1019 = vrot.slane %v882, %v1018
  %1021 = vbcast.lane.b32.xlu0 %v1019, 256
  %v1022 = vpop.permute.xlu0 %1021
  %s1024 = sor.u32 256, 8
  %1025 = vbcast.lane.b32.xlu0 %v1019, %s1024
  %v1026 = vpop.permute.xlu0 %1025
  %s1028 = sor.u32 256, 16
  %1029 = vbcast.lane.b32.xlu0 %v1019, %s1028
  %v1030 = vpop.permute.xlu0 %1029
  %s1032 = sor.u32 256, 24
  %1033 = vbcast.lane.b32.xlu0 %v1019, %s1032
  %v1034 = vpop.permute.xlu0 %1033
  %v1035 = vmul.f32 %v17, %v889
  %v1036 = vmul.f32 %v18, %v889
  %v1037 = vmul.f32 %v19, %v893
  %v1038 = vmul.f32 %v20, %v893
  %v1039 = vmul.f32 %v21, %v897
  %v1040 = vmul.f32 %v22, %v897
  %v1041 = vmul.f32 %v23, %v901
  %v1042 = vmul.f32 %v24, %v901
  %v1043 = vmul.f32 %v25, %v908
  %v1044 = vmul.f32 %v26, %v908
  %v1045 = vmul.f32 %v27, %v912
  %v1046 = vmul.f32 %v28, %v912
  %v1047 = vmul.f32 %v29, %v916
  %v1048 = vmul.f32 %v30, %v916
  %v1049 = vmul.f32 %v31, %v920
  %v1050 = vmul.f32 %v32, %v920
  %v1051 = vmul.f32 %v33, %v927
  %v1052 = vmul.f32 %v34, %v927
  %v1053 = vmul.f32 %v35, %v931
  %v1054 = vmul.f32 %v36, %v931
  %v1055 = vmul.f32 %v37, %v935
  %v1056 = vmul.f32 %v38, %v935
  %v1057 = vmul.f32 %v39, %v939
  %v1058 = vmul.f32 %v40, %v939
  %v1059 = vmul.f32 %v41, %v946
  %v1060 = vmul.f32 %v42, %v946
  %v1061 = vmul.f32 %v43, %v950
  %v1062 = vmul.f32 %v44, %v950
  %v1063 = vmul.f32 %v45, %v954
  %v1064 = vmul.f32 %v46, %v954
  %v1065 = vmul.f32 %v47, %v958
  %v1066 = vmul.f32 %v48, %v958
  %v1067 = vmul.f32 %v49, %v965
  %v1068 = vmul.f32 %v50, %v965
  %v1069 = vmul.f32 %v51, %v969
  %v1070 = vmul.f32 %v52, %v969
  %v1071 = vmul.f32 %v53, %v973
  %v1072 = vmul.f32 %v54, %v973
  %v1073 = vmul.f32 %v55, %v977
  %v1074 = vmul.f32 %v56, %v977
  %v1075 = vmul.f32 %v57, %v984
  %v1076 = vmul.f32 %v58, %v984
  %v1077 = vmul.f32 %v59, %v988
  %v1078 = vmul.f32 %v60, %v988
  %v1079 = vmul.f32 %v61, %v992
  %v1080 = vmul.f32 %v62, %v992
  %v1081 = vmul.f32 %v63, %v996
  %v1082 = vmul.f32 %v64, %v996
  %v1083 = vmul.f32 %v65, %v1003
  %v1084 = vmul.f32 %v66, %v1003
  %v1085 = vmul.f32 %v67, %v1007
  %v1086 = vmul.f32 %v68, %v1007
  %v1087 = vmul.f32 %v69, %v1011
  %v1088 = vmul.f32 %v70, %v1011
  %v1089 = vmul.f32 %v71, %v1015
  %v1090 = vmul.f32 %v72, %v1015
  %v1091 = vmul.f32 %v73, %v1022
  %v1092 = vmul.f32 %v74, %v1022
  %v1093 = vmul.f32 %v75, %v1026
  %v1094 = vmul.f32 %v76, %v1026
  %v1095 = vmul.f32 %v77, %v1030
  %v1096 = vmul.f32 %v78, %v1030
  %v1097 = vmul.f32 %v79, %v1034
  %v1098 = vmul.f32 %v80, %v1034
  %1099 = vst [vmem:[%s4] sm:$0xff] %v1035
  %1100 = vst [vmem:[%s4 + $0x8] sm:$0xff] %v1036
  %1101 = vst [vmem:[%s4 + $0x10] sm:$0xff] %v1037
  %1102 = vst [vmem:[%s4 + $0x18] sm:$0xff] %v1038
  %1103 = vst [vmem:[%s4 + $0x20] sm:$0xff] %v1039
  %1104 = vst [vmem:[%s4 + $0x28] sm:$0xff] %v1040
  %1105 = vst [vmem:[%s4 + $0x30] sm:$0xff] %v1041
  %1106 = vst [vmem:[%s4 + $0x38] sm:$0xff] %v1042
  %1107 = vst [vmem:[%s4 + $0x40] sm:$0xff] %v1043
  %1108 = vst [vmem:[%s4 + $0x48] sm:$0xff] %v1044
  %1109 = vst [vmem:[%s4 + $0x50] sm:$0xff] %v1045
  %1110 = vst [vmem:[%s4 + $0x58] sm:$0xff] %v1046
  %1111 = vst [vmem:[%s4 + $0x60] sm:$0xff] %v1047
  %1112 = vst [vmem:[%s4 + $0x68] sm:$0xff] %v1048
  %1113 = vst [vmem:[%s4 + $0x70] sm:$0xff] %v1049
  %1114 = vst [vmem:[%s4 + $0x78] sm:$0xff] %v1050
  %1115 = vst [vmem:[%s4 + $0x80] sm:$0xff] %v1051
  %1116 = vst [vmem:[%s4 + $0x88] sm:$0xff] %v1052
  %1117 = vst [vmem:[%s4 + $0x90] sm:$0xff] %v1053
  %1118 = vst [vmem:[%s4 + $0x98] sm:$0xff] %v1054
  %1119 = vst [vmem:[%s4 + $0xa0] sm:$0xff] %v1055
  %1120 = vst [vmem:[%s4 + $0xa8] sm:$0xff] %v1056
  %1121 = vst [vmem:[%s4 + $0xb0] sm:$0xff] %v1057
  %1122 = vst [vmem:[%s4 + $0xb8] sm:$0xff] %v1058
  %1123 = vst [vmem:[%s4 + $0xc0] sm:$0xff] %v1059
  %1124 = vst [vmem:[%s4 + $0xc8] sm:$0xff] %v1060
  %1125 = vst [vmem:[%s4 + $0xd0] sm:$0xff] %v1061
  %1126 = vst [vmem:[%s4 + $0xd8] sm:$0xff] %v1062
  %1127 = vst [vmem:[%s4 + $0xe0] sm:$0xff] %v1063
  %1128 = vst [vmem:[%s4 + $0xe8] sm:$0xff] %v1064
  %1129 = vst [vmem:[%s4 + $0xf0] sm:$0xff] %v1065
  %1130 = vst [vmem:[%s4 + $0xf8] sm:$0xff] %v1066
  %1131 = vst [vmem:[%s4 + $0x100] sm:$0xff] %v1067
  %1132 = vst [vmem:[%s4 + $0x108] sm:$0xff] %v1068
  %1133 = vst [vmem:[%s4 + $0x110] sm:$0xff] %v1069
  %1134 = vst [vmem:[%s4 + $0x118] sm:$0xff] %v1070
  %1135 = vst [vmem:[%s4 + $0x120] sm:$0xff] %v1071
  %1136 = vst [vmem:[%s4 + $0x128] sm:$0xff] %v1072
  %1137 = vst [vmem:[%s4 + $0x130] sm:$0xff] %v1073
  %1138 = vst [vmem:[%s4 + $0x138] sm:$0xff] %v1074
  %1139 = vst [vmem:[%s4 + $0x140] sm:$0xff] %v1075
  %1140 = vst [vmem:[%s4 + $0x148] sm:$0xff] %v1076
  %1141 = vst [vmem:[%s4 + $0x150] sm:$0xff] %v1077
  %1142 = vst [vmem:[%s4 + $0x158] sm:$0xff] %v1078
  %1143 = vst [vmem:[%s4 + $0x160] sm:$0xff] %v1079
  %1144 = vst [vmem:[%s4 + $0x168] sm:$0xff] %v1080
  %1145 = vst [vmem:[%s4 + $0x170] sm:$0xff] %v1081
  %1146 = vst [vmem:[%s4 + $0x178] sm:$0xff] %v1082
  %1147 = vst [vmem:[%s4 + $0x180] sm:$0xff] %v1083
  %1148 = vst [vmem:[%s4 + $0x188] sm:$0xff] %v1084
  %1149 = vst [vmem:[%s4 + $0x190] sm:$0xff] %v1085
  %1150 = vst [vmem:[%s4 + $0x198] sm:$0xff] %v1086
  %1151 = vst [vmem:[%s4 + $0x1a0] sm:$0xff] %v1087
  %1152 = vst [vmem:[%s4 + $0x1a8] sm:$0xff] %v1088
  %1153 = vst [vmem:[%s4 + $0x1b0] sm:$0xff] %v1089
  %1154 = vst [vmem:[%s4 + $0x1b8] sm:$0xff] %v1090
  %1155 = vst [vmem:[%s4 + $0x1c0] sm:$0xff] %v1091
  %1156 = vst [vmem:[%s4 + $0x1c8] sm:$0xff] %v1092
  %1157 = vst [vmem:[%s4 + $0x1d0] sm:$0xff] %v1093
  %1158 = vst [vmem:[%s4 + $0x1d8] sm:$0xff] %v1094
  %1159 = vst [vmem:[%s4 + $0x1e0] sm:$0xff] %v1095
  %1160 = vst [vmem:[%s4 + $0x1e8] sm:$0xff] %v1096
  %1161 = vst [vmem:[%s4 + $0x1f0] sm:$0xff] %v1097
  %1162 = vst [vmem:[%s4 + $0x1f8] sm:$0xff] %v1098
  %v1163 = vld [vmem:[%s4] sm:$0xff]
  %v1164 = vld [vmem:[%s4 + $0x8] sm:$0xff]
  %v1165 = vld [vmem:[%s4 + $0x10] sm:$0xff]
  %v1166 = vld [vmem:[%s4 + $0x18] sm:$0xff]
  %v1167 = vld [vmem:[%s4 + $0x20] sm:$0xff]
  %v1168 = vld [vmem:[%s4 + $0x28] sm:$0xff]
  %v1169 = vld [vmem:[%s4 + $0x30] sm:$0xff]
  %v1170 = vld [vmem:[%s4 + $0x38] sm:$0xff]
  %v1171 = vld [vmem:[%s4 + $0x40] sm:$0xff]
  %v1172 = vld [vmem:[%s4 + $0x48] sm:$0xff]
  %v1173 = vld [vmem:[%s4 + $0x50] sm:$0xff]
  %v1174 = vld [vmem:[%s4 + $0x58] sm:$0xff]
  %v1175 = vld [vmem:[%s4 + $0x60] sm:$0xff]
  %v1176 = vld [vmem:[%s4 + $0x68] sm:$0xff]
  %v1177 = vld [vmem:[%s4 + $0x70] sm:$0xff]
  %v1178 = vld [vmem:[%s4 + $0x78] sm:$0xff]
  %v1179 = vld [vmem:[%s4 + $0x80] sm:$0xff]
  %v1180 = vld [vmem:[%s4 + $0x88] sm:$0xff]
  %v1181 = vld [vmem:[%s4 + $0x90] sm:$0xff]
  %v1182 = vld [vmem:[%s4 + $0x98] sm:$0xff]
  %v1183 = vld [vmem:[%s4 + $0xa0] sm:$0xff]
  %v1184 = vld [vmem:[%s4 + $0xa8] sm:$0xff]
  %v1185 = vld [vmem:[%s4 + $0xb0] sm:$0xff]
  %v1186 = vld [vmem:[%s4 + $0xb8] sm:$0xff]
  %v1187 = vld [vmem:[%s4 + $0xc0] sm:$0xff]
  %v1188 = vld [vmem:[%s4 + $0xc8] sm:$0xff]
  %v1189 = vld [vmem:[%s4 + $0xd0] sm:$0xff]
  %v1190 = vld [vmem:[%s4 + $0xd8] sm:$0xff]
  %v1191 = vld [vmem:[%s4 + $0xe0] sm:$0xff]
  %v1192 = vld [vmem:[%s4 + $0xe8] sm:$0xff]
  %v1193 = vld [vmem:[%s4 + $0xf0] sm:$0xff]
  %v1194 = vld [vmem:[%s4 + $0xf8] sm:$0xff]
  %v1195 = vld [vmem:[%s4 + $0x100] sm:$0xff]
  %v1196 = vld [vmem:[%s4 + $0x108] sm:$0xff]
  %v1197 = vld [vmem:[%s4 + $0x110] sm:$0xff]
  %v1198 = vld [vmem:[%s4 + $0x118] sm:$0xff]
  %v1199 = vld [vmem:[%s4 + $0x120] sm:$0xff]
  %v1200 = vld [vmem:[%s4 + $0x128] sm:$0xff]
  %v1201 = vld [vmem:[%s4 + $0x130] sm:$0xff]
  %v1202 = vld [vmem:[%s4 + $0x138] sm:$0xff]
  %v1203 = vld [vmem:[%s4 + $0x140] sm:$0xff]
  %v1204 = vld [vmem:[%s4 + $0x148] sm:$0xff]
  %v1205 = vld [vmem:[%s4 + $0x150] sm:$0xff]
  %v1206 = vld [vmem:[%s4 + $0x158] sm:$0xff]
  %v1207 = vld [vmem:[%s4 + $0x160] sm:$0xff]
  %v1208 = vld [vmem:[%s4 + $0x168] sm:$0xff]
  %v1209 = vld [vmem:[%s4 + $0x170] sm:$0xff]
  %v1210 = vld [vmem:[%s4 + $0x178] sm:$0xff]
  %v1211 = vld [vmem:[%s4 + $0x180] sm:$0xff]
  %v1212 = vld [vmem:[%s4 + $0x188] sm:$0xff]
  %v1213 = vld [vmem:[%s4 + $0x190] sm:$0xff]
  %v1214 = vld [vmem:[%s4 + $0x198] sm:$0xff]
  %v1215 = vld [vmem:[%s4 + $0x1a0] sm:$0xff]
  %v1216 = vld [vmem:[%s4 + $0x1a8] sm:$0xff]
  %v1217 = vld [vmem:[%s4 + $0x1b0] sm:$0xff]
  %v1218 = vld [vmem:[%s4 + $0x1b8] sm:$0xff]
  %v1219 = vld [vmem:[%s4 + $0x1c0] sm:$0xff]
  %v1220 = vld [vmem:[%s4 + $0x1c8] sm:$0xff]
  %v1221 = vld [vmem:[%s4 + $0x1d0] sm:$0xff]
  %v1222 = vld [vmem:[%s4 + $0x1d8] sm:$0xff]
  %v1223 = vld [vmem:[%s4 + $0x1e0] sm:$0xff]
  %v1224 = vld [vmem:[%s4 + $0x1e8] sm:$0xff]
  %v1225 = vld [vmem:[%s4 + $0x1f0] sm:$0xff]
  %v1226 = vld [vmem:[%s4 + $0x1f8] sm:$0xff]
  %v1227 = vadd.f32 %v1163, %v1165
  %v1228 = vadd.f32 %v1227, %v1167
  %v1229 = vadd.f32 %v1228, %v1169
  %v1230 = vrot.slane %v1229, 4
  %v1231 = vadd.f32 %v1229, %v1230
  %v1232 = vrot.slane %v1231, 2
  %v1233 = vadd.f32 %v1231, %v1232
  %v1234 = vrot.slane %v1233, 1
  %v1235 = vadd.f32 %v1233, %v1234
  %v1236 = vadd.f32 %v1164, %v1166
  %v1237 = vadd.f32 %v1236, %v1168
  %v1238 = vadd.f32 %v1237, %v1170
  %v1239 = vrot.slane %v1238, 4
  %v1240 = vadd.f32 %v1238, %v1239
  %v1241 = vrot.slane %v1240, 2
  %v1242 = vadd.f32 %v1240, %v1241
  %v1243 = vrot.slane %v1242, 1
  %v1244 = vadd.f32 %v1242, %v1243
  %v1245 = vadd.f32 %v1171, %v1173
  %v1246 = vadd.f32 %v1245, %v1175
  %v1247 = vadd.f32 %v1246, %v1177
  %v1248 = vrot.slane %v1247, 4
  %v1249 = vadd.f32 %v1247, %v1248
  %v1250 = vrot.slane %v1249, 2
  %v1251 = vadd.f32 %v1249, %v1250
  %v1252 = vrot.slane %v1251, 1
  %v1253 = vadd.f32 %v1251, %v1252
  %v1254 = vadd.f32 %v1172, %v1174
  %v1255 = vadd.f32 %v1254, %v1176
  %v1256 = vadd.f32 %v1255, %v1178
  %v1257 = vrot.slane %v1256, 4
  %v1258 = vadd.f32 %v1256, %v1257
  %v1259 = vrot.slane %v1258, 2
  %v1260 = vadd.f32 %v1258, %v1259
  %v1261 = vrot.slane %v1260, 1
  %v1262 = vadd.f32 %v1260, %v1261
  %v1263 = vadd.f32 %v1179, %v1181
  %v1264 = vadd.f32 %v1263, %v1183
  %v1265 = vadd.f32 %v1264, %v1185
  %v1266 = vrot.slane %v1265, 4
  %v1267 = vadd.f32 %v1265, %v1266
  %v1268 = vrot.slane %v1267, 2
  %v1269 = vadd.f32 %v1267, %v1268
  %v1270 = vrot.slane %v1269, 1
  %v1271 = vadd.f32 %v1269, %v1270
  %v1272 = vadd.f32 %v1180, %v1182
  %v1273 = vadd.f32 %v1272, %v1184
  %v1274 = vadd.f32 %v1273, %v1186
  %v1275 = vrot.slane %v1274, 4
  %v1276 = vadd.f32 %v1274, %v1275
  %v1277 = vrot.slane %v1276, 2
  %v1278 = vadd.f32 %v1276, %v1277
  %v1279 = vrot.slane %v1278, 1
  %v1280 = vadd.f32 %v1278, %v1279
  %v1281 = vadd.f32 %v1187, %v1189
  %v1282 = vadd.f32 %v1281, %v1191
  %v1283 = vadd.f32 %v1282, %v1193
  %v1284 = vrot.slane %v1283, 4
  %v1285 = vadd.f32 %v1283, %v1284
  %v1286 = vrot.slane %v1285, 2
  %v1287 = vadd.f32 %v1285, %v1286
  %v1288 = vrot.slane %v1287, 1
  %v1289 = vadd.f32 %v1287, %v1288
  %v1290 = vadd.f32 %v1188, %v1190
  %v1291 = vadd.f32 %v1290, %v1192
  %v1292 = vadd.f32 %v1291, %v1194
  %v1293 = vrot.slane %v1292, 4
  %v1294 = vadd.f32 %v1292, %v1293
  %v1295 = vrot.slane %v1294, 2
  %v1296 = vadd.f32 %v1294, %v1295
  %v1297 = vrot.slane %v1296, 1
  %v1298 = vadd.f32 %v1296, %v1297
  %v1299 = vadd.f32 %v1195, %v1197
  %v1300 = vadd.f32 %v1299, %v1199
  %v1301 = vadd.f32 %v1300, %v1201
  %v1302 = vrot.slane %v1301, 4
  %v1303 = vadd.f32 %v1301, %v1302
  %v1304 = vrot.slane %v1303, 2
  %v1305 = vadd.f32 %v1303, %v1304
  %v1306 = vrot.slane %v1305, 1
  %v1307 = vadd.f32 %v1305, %v1306
  %v1308 = vadd.f32 %v1196, %v1198
  %v1309 = vadd.f32 %v1308, %v1200
  %v1310 = vadd.f32 %v1309, %v1202
  %v1311 = vrot.slane %v1310, 4
  %v1312 = vadd.f32 %v1310, %v1311
  %v1313 = vrot.slane %v1312, 2
  %v1314 = vadd.f32 %v1312, %v1313
  %v1315 = vrot.slane %v1314, 1
  %v1316 = vadd.f32 %v1314, %v1315
  %v1317 = vadd.f32 %v1203, %v1205
  %v1318 = vadd.f32 %v1317, %v1207
  %v1319 = vadd.f32 %v1318, %v1209
  %v1320 = vrot.slane %v1319, 4
  %v1321 = vadd.f32 %v1319, %v1320
  %v1322 = vrot.slane %v1321, 2
  %v1323 = vadd.f32 %v1321, %v1322
  %v1324 = vrot.slane %v1323, 1
  %v1325 = vadd.f32 %v1323, %v1324
  %v1326 = vadd.f32 %v1204, %v1206
  %v1327 = vadd.f32 %v1326, %v1208
  %v1328 = vadd.f32 %v1327, %v1210
  %v1329 = vrot.slane %v1328, 4
  %v1330 = vadd.f32 %v1328, %v1329
  %v1331 = vrot.slane %v1330, 2
  %v1332 = vadd.f32 %v1330, %v1331
  %v1333 = vrot.slane %v1332, 1
  %v1334 = vadd.f32 %v1332, %v1333
  %v1335 = vadd.f32 %v1211, %v1213
  %v1336 = vadd.f32 %v1335, %v1215
  %v1337 = vadd.f32 %v1336, %v1217
  %v1338 = vrot.slane %v1337, 4
  %v1339 = vadd.f32 %v1337, %v1338
  %v1340 = vrot.slane %v1339, 2
  %v1341 = vadd.f32 %v1339, %v1340
  %v1342 = vrot.slane %v1341, 1
  %v1343 = vadd.f32 %v1341, %v1342
  %v1344 = vadd.f32 %v1212, %v1214
  %v1345 = vadd.f32 %v1344, %v1216
  %v1346 = vadd.f32 %v1345, %v1218
  %v1347 = vrot.slane %v1346, 4
  %v1348 = vadd.f32 %v1346, %v1347
  %v1349 = vrot.slane %v1348, 2
  %v1350 = vadd.f32 %v1348, %v1349
  %v1351 = vrot.slane %v1350, 1
  %v1352 = vadd.f32 %v1350, %v1351
  %v1353 = vadd.f32 %v1219, %v1221
  %v1354 = vadd.f32 %v1353, %v1223
  %v1355 = vadd.f32 %v1354, %v1225
  %v1356 = vrot.slane %v1355, 4
  %v1357 = vadd.f32 %v1355, %v1356
  %v1358 = vrot.slane %v1357, 2
  %v1359 = vadd.f32 %v1357, %v1358
  %v1360 = vrot.slane %v1359, 1
  %v1361 = vadd.f32 %v1359, %v1360
  %v1362 = vadd.f32 %v1220, %v1222
  %v1363 = vadd.f32 %v1362, %v1224
  %v1364 = vadd.f32 %v1363, %v1226
  %v1365 = vrot.slane %v1364, 4
  %v1366 = vadd.f32 %v1364, %v1365
  %v1367 = vrot.slane %v1366, 2
  %v1368 = vadd.f32 %v1366, %v1367
  %v1369 = vrot.slane %v1368, 1
  %v1370 = vadd.f32 %v1368, %v1369
  %v1371 = vrcp.pop 32.0
  %v1372 = vmul.f32 %v1235, %v1371
  %v1373 = vmul.f32 %v1244, %v1371
  %v1374 = vmul.f32 %v1253, %v1371
  %v1375 = vmul.f32 %v1262, %v1371
  %v1376 = vmul.f32 %v1271, %v1371
  %v1377 = vmul.f32 %v1280, %v1371
  %v1378 = vmul.f32 %v1289, %v1371
  %v1379 = vmul.f32 %v1298, %v1371
  %v1380 = vmul.f32 %v1307, %v1371
  %v1381 = vmul.f32 %v1316, %v1371
  %v1382 = vmul.f32 %v1325, %v1371
  %v1383 = vmul.f32 %v1334, %v1371
  %v1384 = vmul.f32 %v1343, %v1371
  %v1385 = vmul.f32 %v1352, %v1371
  %v1386 = vmul.f32 %v1361, %v1371
  %v1387 = vmul.f32 %v1370, %v1371
  %v1388 = vmax.f32 %v1163, %v1165
  %v1389 = vmax.f32 %v1388, %v1167
  %v1390 = vmax.f32 %v1389, %v1169
  %v1391 = vrot.slane %v1390, 4
  %v1392 = vmax.f32 %v1390, %v1391
  %v1393 = vrot.slane %v1392, 2
  %v1394 = vmax.f32 %v1392, %v1393
  %v1395 = vrot.slane %v1394, 1
  %v1396 = vmax.f32 %v1394, %v1395
  %v1397 = vmax.f32 %v1164, %v1166
  %v1398 = vmax.f32 %v1397, %v1168
  %v1399 = vmax.f32 %v1398, %v1170
  %v1400 = vrot.slane %v1399, 4
  %v1401 = vmax.f32 %v1399, %v1400
  %v1402 = vrot.slane %v1401, 2
  %v1403 = vmax.f32 %v1401, %v1402
  %v1404 = vrot.slane %v1403, 1
  %v1405 = vmax.f32 %v1403, %v1404
  %v1406 = vmax.f32 %v1171, %v1173
  %v1407 = vmax.f32 %v1406, %v1175
  %v1408 = vmax.f32 %v1407, %v1177
  %v1409 = vrot.slane %v1408, 4
  %v1410 = vmax.f32 %v1408, %v1409
  %v1411 = vrot.slane %v1410, 2
  %v1412 = vmax.f32 %v1410, %v1411
  %v1413 = vrot.slane %v1412, 1
  %v1414 = vmax.f32 %v1412, %v1413
  %v1415 = vmax.f32 %v1172, %v1174
  %v1416 = vmax.f32 %v1415, %v1176
  %v1417 = vmax.f32 %v1416, %v1178
  %v1418 = vrot.slane %v1417, 4
  %v1419 = vmax.f32 %v1417, %v1418
  %v1420 = vrot.slane %v1419, 2
  %v1421 = vmax.f32 %v1419, %v1420
  %v1422 = vrot.slane %v1421, 1
  %v1423 = vmax.f32 %v1421, %v1422
  %v1424 = vmax.f32 %v1179, %v1181
  %v1425 = vmax.f32 %v1424, %v1183
  %v1426 = vmax.f32 %v1425, %v1185
  %v1427 = vrot.slane %v1426, 4
  %v1428 = vmax.f32 %v1426, %v1427
  %v1429 = vrot.slane %v1428, 2
  %v1430 = vmax.f32 %v1428, %v1429
  %v1431 = vrot.slane %v1430, 1
  %v1432 = vmax.f32 %v1430, %v1431
  %v1433 = vmax.f32 %v1180, %v1182
  %v1434 = vmax.f32 %v1433, %v1184
  %v1435 = vmax.f32 %v1434, %v1186
  %v1436 = vrot.slane %v1435, 4
  %v1437 = vmax.f32 %v1435, %v1436
  %v1438 = vrot.slane %v1437, 2
  %v1439 = vmax.f32 %v1437, %v1438
  %v1440 = vrot.slane %v1439, 1
  %v1441 = vmax.f32 %v1439, %v1440
  %v1442 = vmax.f32 %v1187, %v1189
  %v1443 = vmax.f32 %v1442, %v1191
  %v1444 = vmax.f32 %v1443, %v1193
  %v1445 = vrot.slane %v1444, 4
  %v1446 = vmax.f32 %v1444, %v1445
  %v1447 = vrot.slane %v1446, 2
  %v1448 = vmax.f32 %v1446, %v1447
  %v1449 = vrot.slane %v1448, 1
  %v1450 = vmax.f32 %v1448, %v1449
  %v1451 = vmax.f32 %v1188, %v1190
  %v1452 = vmax.f32 %v1451, %v1192
  %v1453 = vmax.f32 %v1452, %v1194
  %v1454 = vrot.slane %v1453, 4
  %v1455 = vmax.f32 %v1453, %v1454
  %v1456 = vrot.slane %v1455, 2
  %v1457 = vmax.f32 %v1455, %v1456
  %v1458 = vrot.slane %v1457, 1
  %v1459 = vmax.f32 %v1457, %v1458
  %v1460 = vmax.f32 %v1195, %v1197
  %v1461 = vmax.f32 %v1460, %v1199
  %v1462 = vmax.f32 %v1461, %v1201
  %v1463 = vrot.slane %v1462, 4
  %v1464 = vmax.f32 %v1462, %v1463
  %v1465 = vrot.slane %v1464, 2
  %v1466 = vmax.f32 %v1464, %v1465
  %v1467 = vrot.slane %v1466, 1
  %v1468 = vmax.f32 %v1466, %v1467
  %v1469 = vmax.f32 %v1196, %v1198
  %v1470 = vmax.f32 %v1469, %v1200
  %v1471 = vmax.f32 %v1470, %v1202
  %v1472 = vrot.slane %v1471, 4
  %v1473 = vmax.f32 %v1471, %v1472
  %v1474 = vrot.slane %v1473, 2
  %v1475 = vmax.f32 %v1473, %v1474
  %v1476 = vrot.slane %v1475, 1
  %v1477 = vmax.f32 %v1475, %v1476
  %v1478 = vmax.f32 %v1203, %v1205
  %v1479 = vmax.f32 %v1478, %v1207
  %v1480 = vmax.f32 %v1479, %v1209
  %v1481 = vrot.slane %v1480, 4
  %v1482 = vmax.f32 %v1480, %v1481
  %v1483 = vrot.slane %v1482, 2
  %v1484 = vmax.f32 %v1482, %v1483
  %v1485 = vrot.slane %v1484, 1
  %v1486 = vmax.f32 %v1484, %v1485
  %v1487 = vmax.f32 %v1204, %v1206
  %v1488 = vmax.f32 %v1487, %v1208
  %v1489 = vmax.f32 %v1488, %v1210
  %v1490 = vrot.slane %v1489, 4
  %v1491 = vmax.f32 %v1489, %v1490
  %v1492 = vrot.slane %v1491, 2
  %v1493 = vmax.f32 %v1491, %v1492
  %v1494 = vrot.slane %v1493, 1
  %v1495 = vmax.f32 %v1493, %v1494
  %v1496 = vmax.f32 %v1211, %v1213
  %v1497 = vmax.f32 %v1496, %v1215
  %v1498 = vmax.f32 %v1497, %v1217
  %v1499 = vrot.slane %v1498, 4
  %v1500 = vmax.f32 %v1498, %v1499
  %v1501 = vrot.slane %v1500, 2
  %v1502 = vmax.f32 %v1500, %v1501
  %v1503 = vrot.slane %v1502, 1
  %v1504 = vmax.f32 %v1502, %v1503
  %v1505 = vmax.f32 %v1212, %v1214
  %v1506 = vmax.f32 %v1505, %v1216
  %v1507 = vmax.f32 %v1506, %v1218
  %v1508 = vrot.slane %v1507, 4
  %v1509 = vmax.f32 %v1507, %v1508
  %v1510 = vrot.slane %v1509, 2
  %v1511 = vmax.f32 %v1509, %v1510
  %v1512 = vrot.slane %v1511, 1
  %v1513 = vmax.f32 %v1511, %v1512
  %v1514 = vmax.f32 %v1219, %v1221
  %v1515 = vmax.f32 %v1514, %v1223
  %v1516 = vmax.f32 %v1515, %v1225
  %v1517 = vrot.slane %v1516, 4
  %v1518 = vmax.f32 %v1516, %v1517
  %v1519 = vrot.slane %v1518, 2
  %v1520 = vmax.f32 %v1518, %v1519
  %v1521 = vrot.slane %v1520, 1
  %v1522 = vmax.f32 %v1520, %v1521
  %v1523 = vmax.f32 %v1220, %v1222
  %v1524 = vmax.f32 %v1523, %v1224
  %v1525 = vmax.f32 %v1524, %v1226
  %v1526 = vrot.slane %v1525, 4
  %v1527 = vmax.f32 %v1525, %v1526
  %v1528 = vrot.slane %v1527, 2
  %v1529 = vmax.f32 %v1527, %v1528
  %v1530 = vrot.slane %v1529, 1
  %v1531 = vmax.f32 %v1529, %v1530
  %v1548 = vsel %vm498, %v1374, %v1372
  %v1549 = vsel %vm500, %v1376, %v1548
  %v1550 = vsel %vm502, %v1378, %v1549
  %v1551 = vsel %vm504, %v1380, %v1550
  %v1552 = vsel %vm506, %v1382, %v1551
  %v1553 = vsel %vm508, %v1384, %v1552
  %v1554 = vsel %vm510, %v1386, %v1553
  %v1555 = vsel %vm498, %v1375, %v1373
  %v1556 = vsel %vm500, %v1377, %v1555
  %v1557 = vsel %vm502, %v1379, %v1556
  %v1558 = vsel %vm504, %v1381, %v1557
  %v1559 = vsel %vm506, %v1383, %v1558
  %v1560 = vsel %vm508, %v1385, %v1559
  %v1561 = vsel %vm510, %v1387, %v1560
  %v1580 = vsel %vm498, %v1414, %v1396
  %v1581 = vsel %vm500, %v1432, %v1580
  %v1582 = vsel %vm502, %v1450, %v1581
  %v1583 = vsel %vm504, %v1468, %v1582
  %v1584 = vsel %vm506, %v1486, %v1583
  %v1585 = vsel %vm508, %v1504, %v1584
  %v1586 = vsel %vm510, %v1522, %v1585
  %v1587 = vsel %vm498, %v1423, %v1405
  %v1588 = vsel %vm500, %v1441, %v1587
  %v1589 = vsel %vm502, %v1459, %v1588
  %v1590 = vsel %vm504, %v1477, %v1589
  %v1591 = vsel %vm506, %v1495, %v1590
  %v1592 = vsel %vm508, %v1513, %v1591
  %v1593 = vsel %vm510, %v1531, %v1592
  %v1596 = vpack.c.bf16 %v1554, %v1554
  %v1597 = vpack.c.bf16 %v1561, %v1561
  %v1598 = vpack.c.bf16 %v1586, %v1586
  %v1599 = vpack.c.bf16 %v1593, %v1593
  %v1600 = vld [vmem:[%s3] sm:$0xff]
  %v1601 = vld [vmem:[%s3 + $0x8] sm:$0xff]
  %v1602 = vld [vmem:[%s3 + $0x10] sm:$0xff]
  %v1603 = vld [vmem:[%s3 + $0x18] sm:$0xff]
  %v1604 = vld [vmem:[%s3 + $0x20] sm:$0xff]
  %v1605 = vld [vmem:[%s3 + $0x28] sm:$0xff]
  %v1606 = vld [vmem:[%s3 + $0x30] sm:$0xff]
  %v1607 = vld [vmem:[%s3 + $0x38] sm:$0xff]
  %v1608 = vld [vmem:[%s3 + $0x40] sm:$0xff]
  %v1609 = vld [vmem:[%s3 + $0x48] sm:$0xff]
  %v1610 = vld [vmem:[%s3 + $0x50] sm:$0xff]
  %v1611 = vld [vmem:[%s3 + $0x58] sm:$0xff]
  %v1612 = vld [vmem:[%s3 + $0x60] sm:$0xff]
  %v1613 = vld [vmem:[%s3 + $0x68] sm:$0xff]
  %v1614 = vld [vmem:[%s3 + $0x70] sm:$0xff]
  %v1615 = vld [vmem:[%s3 + $0x78] sm:$0xff]
  %v1616 = vld [vmem:[%s3 + $0x80] sm:$0xff]
  %v1617 = vld [vmem:[%s3 + $0x88] sm:$0xff]
  %v1618 = vld [vmem:[%s3 + $0x90] sm:$0xff]
  %v1619 = vld [vmem:[%s3 + $0x98] sm:$0xff]
  %v1620 = vld [vmem:[%s3 + $0xa0] sm:$0xff]
  %v1621 = vld [vmem:[%s3 + $0xa8] sm:$0xff]
  %v1622 = vld [vmem:[%s3 + $0xb0] sm:$0xff]
  %v1623 = vld [vmem:[%s3 + $0xb8] sm:$0xff]
  %v1624 = vld [vmem:[%s3 + $0xc0] sm:$0xff]
  %v1625 = vld [vmem:[%s3 + $0xc8] sm:$0xff]
  %v1626 = vld [vmem:[%s3 + $0xd0] sm:$0xff]
  %v1627 = vld [vmem:[%s3 + $0xd8] sm:$0xff]
  %v1628 = vld [vmem:[%s3 + $0xe0] sm:$0xff]
  %v1629 = vld [vmem:[%s3 + $0xe8] sm:$0xff]
  %v1630 = vld [vmem:[%s3 + $0xf0] sm:$0xff]
  %v1631 = vld [vmem:[%s3 + $0xf8] sm:$0xff]
  %v1632 = vld [vmem:[%s3 + $0x100] sm:$0xff]
  %v1633 = vld [vmem:[%s3 + $0x108] sm:$0xff]
  %v1634 = vld [vmem:[%s3 + $0x110] sm:$0xff]
  %v1635 = vld [vmem:[%s3 + $0x118] sm:$0xff]
  %v1636 = vld [vmem:[%s3 + $0x120] sm:$0xff]
  %v1637 = vld [vmem:[%s3 + $0x128] sm:$0xff]
  %v1638 = vld [vmem:[%s3 + $0x130] sm:$0xff]
  %v1639 = vld [vmem:[%s3 + $0x138] sm:$0xff]
  %v1640 = vld [vmem:[%s3 + $0x140] sm:$0xff]
  %v1641 = vld [vmem:[%s3 + $0x148] sm:$0xff]
  %v1642 = vld [vmem:[%s3 + $0x150] sm:$0xff]
  %v1643 = vld [vmem:[%s3 + $0x158] sm:$0xff]
  %v1644 = vld [vmem:[%s3 + $0x160] sm:$0xff]
  %v1645 = vld [vmem:[%s3 + $0x168] sm:$0xff]
  %v1646 = vld [vmem:[%s3 + $0x170] sm:$0xff]
  %v1647 = vld [vmem:[%s3 + $0x178] sm:$0xff]
  %v1648 = vld [vmem:[%s3 + $0x180] sm:$0xff]
  %v1649 = vld [vmem:[%s3 + $0x188] sm:$0xff]
  %v1650 = vld [vmem:[%s3 + $0x190] sm:$0xff]
  %v1651 = vld [vmem:[%s3 + $0x198] sm:$0xff]
  %v1652 = vld [vmem:[%s3 + $0x1a0] sm:$0xff]
  %v1653 = vld [vmem:[%s3 + $0x1a8] sm:$0xff]
  %v1654 = vld [vmem:[%s3 + $0x1b0] sm:$0xff]
  %v1655 = vld [vmem:[%s3 + $0x1b8] sm:$0xff]
  %v1656 = vld [vmem:[%s3 + $0x1c0] sm:$0xff]
  %v1657 = vld [vmem:[%s3 + $0x1c8] sm:$0xff]
  %v1658 = vld [vmem:[%s3 + $0x1d0] sm:$0xff]
  %v1659 = vld [vmem:[%s3 + $0x1d8] sm:$0xff]
  %v1660 = vld [vmem:[%s3 + $0x1e0] sm:$0xff]
  %v1661 = vld [vmem:[%s3 + $0x1e8] sm:$0xff]
  %v1662 = vld [vmem:[%s3 + $0x1f0] sm:$0xff]
  %v1663 = vld [vmem:[%s3 + $0x1f8] sm:$0xff]
  %v1728 = vunpack.c.l.b16 %v1600
  %v1729 = vunpack.c.h.b16 %v1600
  %v1730 = vunpack.c.l.b16 %v1601
  %v1731 = vunpack.c.h.b16 %v1601
  %v1732 = vunpack.c.l.b16 %v1602
  %v1733 = vunpack.c.h.b16 %v1602
  %v1734 = vunpack.c.l.b16 %v1603
  %v1735 = vunpack.c.h.b16 %v1603
  %v1736 = vunpack.c.l.b16 %v1604
  %v1737 = vunpack.c.h.b16 %v1604
  %v1738 = vunpack.c.l.b16 %v1605
  %v1739 = vunpack.c.h.b16 %v1605
  %v1740 = vunpack.c.l.b16 %v1606
  %v1741 = vunpack.c.h.b16 %v1606
  %v1742 = vunpack.c.l.b16 %v1607
  %v1743 = vunpack.c.h.b16 %v1607
  %v1744 = vunpack.c.l.b16 %v1608
  %v1745 = vunpack.c.h.b16 %v1608
  %v1746 = vunpack.c.l.b16 %v1609
  %v1747 = vunpack.c.h.b16 %v1609
  %v1748 = vunpack.c.l.b16 %v1610
  %v1749 = vunpack.c.h.b16 %v1610
  %v1750 = vunpack.c.l.b16 %v1611
  %v1751 = vunpack.c.h.b16 %v1611
  %v1752 = vunpack.c.l.b16 %v1612
  %v1753 = vunpack.c.h.b16 %v1612
  %v1754 = vunpack.c.l.b16 %v1613
  %v1755 = vunpack.c.h.b16 %v1613
  %v1756 = vunpack.c.l.b16 %v1614
  %v1757 = vunpack.c.h.b16 %v1614
  %v1758 = vunpack.c.l.b16 %v1615
  %v1759 = vunpack.c.h.b16 %v1615
  %v1760 = vunpack.c.l.b16 %v1616
  %v1761 = vunpack.c.h.b16 %v1616
  %v1762 = vunpack.c.l.b16 %v1617
  %v1763 = vunpack.c.h.b16 %v1617
  %v1764 = vunpack.c.l.b16 %v1618
  %v1765 = vunpack.c.h.b16 %v1618
  %v1766 = vunpack.c.l.b16 %v1619
  %v1767 = vunpack.c.h.b16 %v1619
  %v1768 = vunpack.c.l.b16 %v1620
  %v1769 = vunpack.c.h.b16 %v1620
  %v1770 = vunpack.c.l.b16 %v1621
  %v1771 = vunpack.c.h.b16 %v1621
  %v1772 = vunpack.c.l.b16 %v1622
  %v1773 = vunpack.c.h.b16 %v1622
  %v1774 = vunpack.c.l.b16 %v1623
  %v1775 = vunpack.c.h.b16 %v1623
  %v1776 = vunpack.c.l.b16 %v1624
  %v1777 = vunpack.c.h.b16 %v1624
  %v1778 = vunpack.c.l.b16 %v1625
  %v1779 = vunpack.c.h.b16 %v1625
  %v1780 = vunpack.c.l.b16 %v1626
  %v1781 = vunpack.c.h.b16 %v1626
  %v1782 = vunpack.c.l.b16 %v1627
  %v1783 = vunpack.c.h.b16 %v1627
  %v1784 = vunpack.c.l.b16 %v1628
  %v1785 = vunpack.c.h.b16 %v1628
  %v1786 = vunpack.c.l.b16 %v1629
  %v1787 = vunpack.c.h.b16 %v1629
  %v1788 = vunpack.c.l.b16 %v1630
  %v1789 = vunpack.c.h.b16 %v1630
  %v1790 = vunpack.c.l.b16 %v1631
  %v1791 = vunpack.c.h.b16 %v1631
  %v1792 = vunpack.c.l.b16 %v1632
  %v1793 = vunpack.c.h.b16 %v1632
  %v1794 = vunpack.c.l.b16 %v1633
  %v1795 = vunpack.c.h.b16 %v1633
  %v1796 = vunpack.c.l.b16 %v1634
  %v1797 = vunpack.c.h.b16 %v1634
  %v1798 = vunpack.c.l.b16 %v1635
  %v1799 = vunpack.c.h.b16 %v1635
  %v1800 = vunpack.c.l.b16 %v1636
  %v1801 = vunpack.c.h.b16 %v1636
  %v1802 = vunpack.c.l.b16 %v1637
  %v1803 = vunpack.c.h.b16 %v1637
  %v1804 = vunpack.c.l.b16 %v1638
  %v1805 = vunpack.c.h.b16 %v1638
  %v1806 = vunpack.c.l.b16 %v1639
  %v1807 = vunpack.c.h.b16 %v1639
  %v1808 = vunpack.c.l.b16 %v1640
  %v1809 = vunpack.c.h.b16 %v1640
  %v1810 = vunpack.c.l.b16 %v1641
  %v1811 = vunpack.c.h.b16 %v1641
  %v1812 = vunpack.c.l.b16 %v1642
  %v1813 = vunpack.c.h.b16 %v1642
  %v1814 = vunpack.c.l.b16 %v1643
  %v1815 = vunpack.c.h.b16 %v1643
  %v1816 = vunpack.c.l.b16 %v1644
  %v1817 = vunpack.c.h.b16 %v1644
  %v1818 = vunpack.c.l.b16 %v1645
  %v1819 = vunpack.c.h.b16 %v1645
  %v1820 = vunpack.c.l.b16 %v1646
  %v1821 = vunpack.c.h.b16 %v1646
  %v1822 = vunpack.c.l.b16 %v1647
  %v1823 = vunpack.c.h.b16 %v1647
  %v1824 = vunpack.c.l.b16 %v1648
  %v1825 = vunpack.c.h.b16 %v1648
  %v1826 = vunpack.c.l.b16 %v1649
  %v1827 = vunpack.c.h.b16 %v1649
  %v1828 = vunpack.c.l.b16 %v1650
  %v1829 = vunpack.c.h.b16 %v1650
  %v1830 = vunpack.c.l.b16 %v1651
  %v1831 = vunpack.c.h.b16 %v1651
  %v1832 = vunpack.c.l.b16 %v1652
  %v1833 = vunpack.c.h.b16 %v1652
  %v1834 = vunpack.c.l.b16 %v1653
  %v1835 = vunpack.c.h.b16 %v1653
  %v1836 = vunpack.c.l.b16 %v1654
  %v1837 = vunpack.c.h.b16 %v1654
  %v1838 = vunpack.c.l.b16 %v1655
  %v1839 = vunpack.c.h.b16 %v1655
  %v1840 = vunpack.c.l.b16 %v1656
  %v1841 = vunpack.c.h.b16 %v1656
  %v1842 = vunpack.c.l.b16 %v1657
  %v1843 = vunpack.c.h.b16 %v1657
  %v1844 = vunpack.c.l.b16 %v1658
  %v1845 = vunpack.c.h.b16 %v1658
  %v1846 = vunpack.c.l.b16 %v1659
  %v1847 = vunpack.c.h.b16 %v1659
  %v1848 = vunpack.c.l.b16 %v1660
  %v1849 = vunpack.c.h.b16 %v1660
  %v1850 = vunpack.c.l.b16 %v1661
  %v1851 = vunpack.c.h.b16 %v1661
  %v1852 = vunpack.c.l.b16 %v1662
  %v1853 = vunpack.c.h.b16 %v1662
  %v1854 = vunpack.c.l.b16 %v1663
  %v1855 = vunpack.c.h.b16 %v1663
  %v1856 = vpack.c.b16 %v1730, %v1728
  %v1857 = vpack.c.b16 %v1731, %v1729
  %v1858 = vpack.c.b16 %v1734, %v1732
  %v1859 = vpack.c.b16 %v1735, %v1733
  %v1860 = vpack.c.b16 %v1738, %v1736
  %v1861 = vpack.c.b16 %v1739, %v1737
  %v1862 = vpack.c.b16 %v1742, %v1740
  %v1863 = vpack.c.b16 %v1743, %v1741
  %v1864 = vpack.c.b16 %v1746, %v1744
  %v1865 = vpack.c.b16 %v1747, %v1745
  %v1866 = vpack.c.b16 %v1750, %v1748
  %v1867 = vpack.c.b16 %v1751, %v1749
  %v1868 = vpack.c.b16 %v1754, %v1752
  %v1869 = vpack.c.b16 %v1755, %v1753
  %v1870 = vpack.c.b16 %v1758, %v1756
  %v1871 = vpack.c.b16 %v1759, %v1757
  %v1872 = vpack.c.b16 %v1762, %v1760
  %v1873 = vpack.c.b16 %v1763, %v1761
  %v1874 = vpack.c.b16 %v1766, %v1764
  %v1875 = vpack.c.b16 %v1767, %v1765
  %v1876 = vpack.c.b16 %v1770, %v1768
  %v1877 = vpack.c.b16 %v1771, %v1769
  %v1878 = vpack.c.b16 %v1774, %v1772
  %v1879 = vpack.c.b16 %v1775, %v1773
  %v1880 = vpack.c.b16 %v1778, %v1776
  %v1881 = vpack.c.b16 %v1779, %v1777
  %v1882 = vpack.c.b16 %v1782, %v1780
  %v1883 = vpack.c.b16 %v1783, %v1781
  %v1884 = vpack.c.b16 %v1786, %v1784
  %v1885 = vpack.c.b16 %v1787, %v1785
  %v1886 = vpack.c.b16 %v1790, %v1788
  %v1887 = vpack.c.b16 %v1791, %v1789
  %v1888 = vpack.c.b16 %v1794, %v1792
  %v1889 = vpack.c.b16 %v1795, %v1793
  %v1890 = vpack.c.b16 %v1798, %v1796
  %v1891 = vpack.c.b16 %v1799, %v1797
  %v1892 = vpack.c.b16 %v1802, %v1800
  %v1893 = vpack.c.b16 %v1803, %v1801
  %v1894 = vpack.c.b16 %v1806, %v1804
  %v1895 = vpack.c.b16 %v1807, %v1805
  %v1896 = vpack.c.b16 %v1810, %v1808
  %v1897 = vpack.c.b16 %v1811, %v1809
  %v1898 = vpack.c.b16 %v1814, %v1812
  %v1899 = vpack.c.b16 %v1815, %v1813
  %v1900 = vpack.c.b16 %v1818, %v1816
  %v1901 = vpack.c.b16 %v1819, %v1817
  %v1902 = vpack.c.b16 %v1822, %v1820
  %v1903 = vpack.c.b16 %v1823, %v1821
  %v1904 = vpack.c.b16 %v1826, %v1824
  %v1905 = vpack.c.b16 %v1827, %v1825
  %v1906 = vpack.c.b16 %v1830, %v1828
  %v1907 = vpack.c.b16 %v1831, %v1829
  %v1908 = vpack.c.b16 %v1834, %v1832
  %v1909 = vpack.c.b16 %v1835, %v1833
  %v1910 = vpack.c.b16 %v1838, %v1836
  %v1911 = vpack.c.b16 %v1839, %v1837
  %v1912 = vpack.c.b16 %v1842, %v1840
  %v1913 = vpack.c.b16 %v1843, %v1841
  %v1914 = vpack.c.b16 %v1846, %v1844
  %v1915 = vpack.c.b16 %v1847, %v1845
  %v1916 = vpack.c.b16 %v1850, %v1848
  %v1917 = vpack.c.b16 %v1851, %v1849
  %v1918 = vpack.c.b16 %v1854, %v1852
  %v1919 = vpack.c.b16 %v1855, %v1853
  %1984 = vmatprep.subr.bf16.mxu0 %v1857
  %1985 = vmatpush1.bf16.msra.mxu0 %v1856
  %1986 = vmatprep.subr.bf16.mxu0 %v1859
  %1987 = vmatpush1.bf16.msra.mxu0 %v1858
  %1988 = vmatprep.subr.bf16.mxu0 %v1861
  %1989 = vmatpush1.bf16.msra.mxu0 %v1860
  %1990 = vmatprep.subr.bf16.mxu0 %v1863
  %1991 = vmatpush1.bf16.msra.mxu0 %v1862
  %1992 = vmatprep.subr.bf16.mxu0 %v1865
  %1993 = vmatpush1.bf16.msra.mxu0 %v1864
  %1994 = vmatprep.subr.bf16.mxu0 %v1867
  %1995 = vmatpush1.bf16.msra.mxu0 %v1866
  %1996 = vmatprep.subr.bf16.mxu0 %v1869
  %1997 = vmatpush1.bf16.msra.mxu0 %v1868
  %1998 = vmatprep.subr.bf16.mxu0 %v1871
  %1999 = vmatpush1.bf16.msra.mxu0 %v1870
  %2000 = vmatprep.subr.bf16.mxu0 %v1873
  %2001 = vmatpush1.bf16.msra.mxu0 %v1872
  %2002 = vmatprep.subr.bf16.mxu0 %v1875
  %2003 = vmatpush1.bf16.msra.mxu0 %v1874
  %2004 = vmatprep.subr.bf16.mxu0 %v1877
  %2005 = vmatpush1.bf16.msra.mxu0 %v1876
  %2006 = vmatprep.subr.bf16.mxu0 %v1879
  %2007 = vmatpush1.bf16.msra.mxu0 %v1878
  %2008 = vmatprep.subr.bf16.mxu0 %v1881
  %2009 = vmatpush1.bf16.msra.mxu0 %v1880
  %2010 = vmatprep.subr.bf16.mxu0 %v1883
  %2011 = vmatpush1.bf16.msra.mxu0 %v1882
  %2012 = vmatprep.subr.bf16.mxu0 %v1885
  %2013 = vmatpush1.bf16.msra.mxu0 %v1884
  %2014 = vmatprep.subr.bf16.mxu0 %v1887
  %2015 = vmatpush1.bf16.msra.mxu0 %v1886
  %2016 = vmatprep.mubr.bf16.mxu0 %v1597
  %2017 = vmatmul.mubr.bf16.gmra.mrb[0].mxu0 %v1596
  %v2018 = vpop.f32.mrb[0].mxu0
  %v2019 = vadd.f32 0.0, %v2018
  %v2020 = vpop.f32.mrb[0].mxu0
  %v2021 = vadd.f32 0.0, %v2020
  %v2022 = vpop.f32.mrb[0].mxu0
  %v2023 = vpop.f32.mrb[0].mxu0
  %2024 = vdwg.mxu0
  %2025 = vmatprep.subr.bf16.mxu0 %v1889
  %2026 = vmatpush1.bf16.msra.mxu0 %v1888
  %2027 = vmatprep.subr.bf16.mxu0 %v1891
  %2028 = vmatpush1.bf16.msra.mxu0 %v1890
  %2029 = vmatprep.subr.bf16.mxu0 %v1893
  %2030 = vmatpush1.bf16.msra.mxu0 %v1892
  %2031 = vmatprep.subr.bf16.mxu0 %v1895
  %2032 = vmatpush1.bf16.msra.mxu0 %v1894
  %2033 = vmatprep.subr.bf16.mxu0 %v1897
  %2034 = vmatpush1.bf16.msra.mxu0 %v1896
  %2035 = vmatprep.subr.bf16.mxu0 %v1899
  %2036 = vmatpush1.bf16.msra.mxu0 %v1898
  %2037 = vmatprep.subr.bf16.mxu0 %v1901
  %2038 = vmatpush1.bf16.msra.mxu0 %v1900
  %2039 = vmatprep.subr.bf16.mxu0 %v1903
  %2040 = vmatpush1.bf16.msra.mxu0 %v1902
  %2041 = vmatprep.subr.bf16.mxu0 %v1905
  %2042 = vmatpush1.bf16.msra.mxu0 %v1904
  %2043 = vmatprep.subr.bf16.mxu0 %v1907
  %2044 = vmatpush1.bf16.msra.mxu0 %v1906
  %2045 = vmatprep.subr.bf16.mxu0 %v1909
  %2046 = vmatpush1.bf16.msra.mxu0 %v1908
  %2047 = vmatprep.subr.bf16.mxu0 %v1911
  %2048 = vmatpush1.bf16.msra.mxu0 %v1910
  %2049 = vmatprep.subr.bf16.mxu0 %v1913
  %2050 = vmatpush1.bf16.msra.mxu0 %v1912
  %2051 = vmatprep.subr.bf16.mxu0 %v1915
  %2052 = vmatpush1.bf16.msra.mxu0 %v1914
  %2053 = vmatprep.subr.bf16.mxu0 %v1917
  %2054 = vmatpush1.bf16.msra.mxu0 %v1916
  %2055 = vmatprep.subr.bf16.mxu0 %v1919
  %2056 = vmatpush1.bf16.msra.mxu0 %v1918
  %2057 = vmatprep.mubr.bf16.mxu0 %v1599
  %2058 = vmatmul.mubr.bf16.gmra.mrb[0].mxu0 %v1598
  %v2059 = vpop.f32.mrb[0].mxu0
  %v2060 = vadd.f32 %v2019, %v2059
  %v2061 = vpop.f32.mrb[0].mxu0
  %v2062 = vadd.f32 %v2021, %v2061
  %v2063 = vpop.f32.mrb[0].mxu0
  %v2064 = vpop.f32.mrb[0].mxu0
  %2065 = vdwg.mxu0
  %v2066 = vxor.u32 %v2060, 2147483648
  %v2067 = vxor.u32 %v2062, 2147483648
  %v2068 = vmul.f32 %v2066, 1.442695
  %v2069 = vpow.pop %v2068
  %v2070 = vmul.f32 %v2067, 1.442695
  %v2071 = vpow.pop %v2070
  %v2072 = vadd.f32 %v2069, 1.0
  %v2073 = vadd.f32 %v2071, 1.0
  %v2074 = vrcp.pop %v2072
  %v2075 = vmul.f32 1.0, %v2074
  %v2076 = vrcp.pop %v2073
  %v2077 = vmul.f32 1.0, %v2076
  %v2080 = vcombine.low %v2075, %v2077
  %v2081 = vcombine.high %v2075, %v2077
  %v2083 = vunpack.c.l.s4 1966171168
  %v2084 = vunpack.c.0.s8 %v2083
  %v2085 = vlaneseq
  %v2086 = vshrl.u32 %v2085, 7
  %v2087 = vsub.s32 %v2084, %v2086
  %v2088 = vrot.slane %v2080, %v2087
  %v2090 = vunpack.c.l.s4 1966171168
  %v2091 = vunpack.c.0.s8 %v2090
  %v2092 = vlaneseq
  %v2093 = vshrl.u32 %v2092, 7
  %v2094 = vsub.s32 %v2091, %v2093
  %v2095 = vrot.slane %v2081, %v2094
  %v2096 = vcombine.high %v2088, %v2088
  %v2097 = vcombine.high %v2095, %v2095
  %v2099 = vunpack.c.l.s4 1966171168
  %v2100 = vunpack.c.0.s8 %v2099
  %v2101 = vlaneseq
  %v2102 = vshrl.u32 %v2101, 7
  %v2103 = vsub.s32 %v2100, %v2102
  %v2104 = vrot.slane %v2088, %v2103
  %v2106 = vunpack.c.l.s4 1966171168
  %v2107 = vunpack.c.0.s8 %v2106
  %v2108 = vlaneseq
  %v2109 = vshrl.u32 %v2108, 7
  %v2110 = vsub.s32 %v2107, %v2109
  %v2111 = vrot.slane %v2095, %v2110
  %v2113 = vunpack.c.l.s4 1966171168
  %v2114 = vunpack.c.0.s8 %v2113
  %v2115 = vlaneseq
  %v2116 = vshrl.u32 %v2115, 7
  %v2117 = vsub.s32 %v2114, %v2116
  %v2118 = vrot.slane %v2096, %v2117
  %v2120 = vunpack.c.l.s4 1966171168
  %v2121 = vunpack.c.0.s8 %v2120
  %v2122 = vlaneseq
  %v2123 = vshrl.u32 %v2122, 7
  %v2124 = vsub.s32 %v2121, %v2123
  %v2125 = vrot.slane %v2097, %v2124
  %v2126 = vcombine.high %v2104, %v2104
  %v2127 = vcombine.high %v2111, %v2111
  %v2128 = vcombine.high %v2118, %v2118
  %v2129 = vcombine.high %v2125, %v2125
  %v2130 = vlaneseq
  %v2131 = vshrl.u32 %v2130, 7
  %v2132 = vsub.s32 0, %v2131
  %v2133 = vrot.slane %v2104, %v2132
  %v2134 = vlaneseq
  %v2135 = vshrl.u32 %v2134, 7
  %v2136 = vsub.s32 1, %v2135
  %v2137 = vrot.slane %v2104, %v2136
  %v2138 = vlaneseq
  %v2139 = vshrl.u32 %v2138, 7
  %v2140 = vsub.s32 0, %v2139
  %v2141 = vrot.slane %v2118, %v2140
  %v2142 = vlaneseq
  %v2143 = vshrl.u32 %v2142, 7
  %v2144 = vsub.s32 1, %v2143
  %v2145 = vrot.slane %v2118, %v2144
  %v2146 = vlaneseq
  %v2147 = vshrl.u32 %v2146, 7
  %v2148 = vsub.s32 0, %v2147
  %v2149 = vrot.slane %v2126, %v2148
  %v2150 = vlaneseq
  %v2151 = vshrl.u32 %v2150, 7
  %v2152 = vsub.s32 1, %v2151
  %v2153 = vrot.slane %v2126, %v2152
  %v2154 = vlaneseq
  %v2155 = vshrl.u32 %v2154, 7
  %v2156 = vsub.s32 0, %v2155
  %v2157 = vrot.slane %v2128, %v2156
  %v2158 = vlaneseq
  %v2159 = vshrl.u32 %v2158, 7
  %v2160 = vsub.s32 1, %v2159
  %v2161 = vrot.slane %v2128, %v2160
  %v2162 = vlaneseq
  %v2163 = vshrl.u32 %v2162, 7
  %v2164 = vsub.s32 0, %v2163
  %v2165 = vrot.slane %v2111, %v2164
  %v2166 = vlaneseq
  %v2167 = vshrl.u32 %v2166, 7
  %v2168 = vsub.s32 1, %v2167
  %v2169 = vrot.slane %v2111, %v2168
  %v2170 = vlaneseq
  %v2171 = vshrl.u32 %v2170, 7
  %v2172 = vsub.s32 0, %v2171
  %v2173 = vrot.slane %v2125, %v2172
  %v2174 = vlaneseq
  %v2175 = vshrl.u32 %v2174, 7
  %v2176 = vsub.s32 1, %v2175
  %v2177 = vrot.slane %v2125, %v2176
  %v2178 = vlaneseq
  %v2179 = vshrl.u32 %v2178, 7
  %v2180 = vsub.s32 0, %v2179
  %v2181 = vrot.slane %v2127, %v2180
  %v2182 = vlaneseq
  %v2183 = vshrl.u32 %v2182, 7
  %v2184 = vsub.s32 1, %v2183
  %v2185 = vrot.slane %v2127, %v2184
  %v2186 = vlaneseq
  %v2187 = vshrl.u32 %v2186, 7
  %v2188 = vsub.s32 0, %v2187
  %v2189 = vrot.slane %v2129, %v2188
  %v2190 = vlaneseq
  %v2191 = vshrl.u32 %v2190, 7
  %v2192 = vsub.s32 1, %v2191
  %v2193 = vrot.slane %v2129, %v2192
  %v2210 = vmul.f32 %v1163, %v2133
  %v2211 = vmul.f32 %v1164, %v2137
  %v2212 = vmul.f32 %v1165, %v2133
  %v2213 = vmul.f32 %v1166, %v2137
  %v2214 = vmul.f32 %v1167, %v2133
  %v2215 = vmul.f32 %v1168, %v2137
  %v2216 = vmul.f32 %v1169, %v2133
  %v2217 = vmul.f32 %v1170, %v2137
  %v2218 = vmul.f32 %v1171, %v2141
  %v2219 = vmul.f32 %v1172, %v2145
  %v2220 = vmul.f32 %v1173, %v2141
  %v2221 = vmul.f32 %v1174, %v2145
  %v2222 = vmul.f32 %v1175, %v2141
  %v2223 = vmul.f32 %v1176, %v2145
  %v2224 = vmul.f32 %v1177, %v2141
  %v2225 = vmul.f32 %v1178, %v2145
  %v2226 = vmul.f32 %v1179, %v2149
  %v2227 = vmul.f32 %v1180, %v2153
  %v2228 = vmul.f32 %v1181, %v2149
  %v2229 = vmul.f32 %v1182, %v2153
  %v2230 = vmul.f32 %v1183, %v2149
  %v2231 = vmul.f32 %v1184, %v2153
  %v2232 = vmul.f32 %v1185, %v2149
  %v2233 = vmul.f32 %v1186, %v2153
  %v2234 = vmul.f32 %v1187, %v2157
  %v2235 = vmul.f32 %v1188, %v2161
  %v2236 = vmul.f32 %v1189, %v2157
  %v2237 = vmul.f32 %v1190, %v2161
  %v2238 = vmul.f32 %v1191, %v2157
  %v2239 = vmul.f32 %v1192, %v2161
  %v2240 = vmul.f32 %v1193, %v2157
  %v2241 = vmul.f32 %v1194, %v2161
  %v2242 = vmul.f32 %v1195, %v2165
  %v2243 = vmul.f32 %v1196, %v2169
  %v2244 = vmul.f32 %v1197, %v2165
  %v2245 = vmul.f32 %v1198, %v2169
  %v2246 = vmul.f32 %v1199, %v2165
  %v2247 = vmul.f32 %v1200, %v2169
  %v2248 = vmul.f32 %v1201, %v2165
  %v2249 = vmul.f32 %v1202, %v2169
  %v2250 = vmul.f32 %v1203, %v2173
  %v2251 = vmul.f32 %v1204, %v2177
  %v2252 = vmul.f32 %v1205, %v2173
  %v2253 = vmul.f32 %v1206, %v2177
  %v2254 = vmul.f32 %v1207, %v2173
  %v2255 = vmul.f32 %v1208, %v2177
  %v2256 = vmul.f32 %v1209, %v2173
  %v2257 = vmul.f32 %v1210, %v2177
  %v2258 = vmul.f32 %v1211, %v2181
  %v2259 = vmul.f32 %v1212, %v2185
  %v2260 = vmul.f32 %v1213, %v2181
  %v2261 = vmul.f32 %v1214, %v2185
  %v2262 = vmul.f32 %v1215, %v2181
  %v2263 = vmul.f32 %v1216, %v2185
  %v2264 = vmul.f32 %v1217, %v2181
  %v2265 = vmul.f32 %v1218, %v2185
  %v2266 = vmul.f32 %v1219, %v2189
  %v2267 = vmul.f32 %v1220, %v2193
  %v2268 = vmul.f32 %v1221, %v2189
  %v2269 = vmul.f32 %v1222, %v2193
  %v2270 = vmul.f32 %v1223, %v2189
  %v2271 = vmul.f32 %v1224, %v2193
  %v2272 = vmul.f32 %v1225, %v2189
  %v2273 = vmul.f32 %v1226, %v2193
  %2274 = vst [vmem:[%s4] sm:$0xff] %v2210
  %2275 = vst [vmem:[%s4 + $0x8] sm:$0xff] %v2211
  %2276 = vst [vmem:[%s4 + $0x10] sm:$0xff] %v2212
  %2277 = vst [vmem:[%s4 + $0x18] sm:$0xff] %v2213
  %2278 = vst [vmem:[%s4 + $0x20] sm:$0xff] %v2214
  %2279 = vst [vmem:[%s4 + $0x28] sm:$0xff] %v2215
  %2280 = vst [vmem:[%s4 + $0x30] sm:$0xff] %v2216
  %2281 = vst [vmem:[%s4 + $0x38] sm:$0xff] %v2217
  %2282 = vst [vmem:[%s4 + $0x40] sm:$0xff] %v2218
  %2283 = vst [vmem:[%s4 + $0x48] sm:$0xff] %v2219
  %2284 = vst [vmem:[%s4 + $0x50] sm:$0xff] %v2220
  %2285 = vst [vmem:[%s4 + $0x58] sm:$0xff] %v2221
  %2286 = vst [vmem:[%s4 + $0x60] sm:$0xff] %v2222
  %2287 = vst [vmem:[%s4 + $0x68] sm:$0xff] %v2223
  %2288 = vst [vmem:[%s4 + $0x70] sm:$0xff] %v2224
  %2289 = vst [vmem:[%s4 + $0x78] sm:$0xff] %v2225
  %2290 = vst [vmem:[%s4 + $0x80] sm:$0xff] %v2226
  %2291 = vst [vmem:[%s4 + $0x88] sm:$0xff] %v2227
  %2292 = vst [vmem:[%s4 + $0x90] sm:$0xff] %v2228
  %2293 = vst [vmem:[%s4 + $0x98] sm:$0xff] %v2229
  %2294 = vst [vmem:[%s4 + $0xa0] sm:$0xff] %v2230
  %2295 = vst [vmem:[%s4 + $0xa8] sm:$0xff] %v2231
  %2296 = vst [vmem:[%s4 + $0xb0] sm:$0xff] %v2232
  %2297 = vst [vmem:[%s4 + $0xb8] sm:$0xff] %v2233
  %2298 = vst [vmem:[%s4 + $0xc0] sm:$0xff] %v2234
  %2299 = vst [vmem:[%s4 + $0xc8] sm:$0xff] %v2235
  %2300 = vst [vmem:[%s4 + $0xd0] sm:$0xff] %v2236
  %2301 = vst [vmem:[%s4 + $0xd8] sm:$0xff] %v2237
  %2302 = vst [vmem:[%s4 + $0xe0] sm:$0xff] %v2238
  %2303 = vst [vmem:[%s4 + $0xe8] sm:$0xff] %v2239
  %2304 = vst [vmem:[%s4 + $0xf0] sm:$0xff] %v2240
  %2305 = vst [vmem:[%s4 + $0xf8] sm:$0xff] %v2241
  %2306 = vst [vmem:[%s4 + $0x100] sm:$0xff] %v2242
  %2307 = vst [vmem:[%s4 + $0x108] sm:$0xff] %v2243
  %2308 = vst [vmem:[%s4 + $0x110] sm:$0xff] %v2244
  %2309 = vst [vmem:[%s4 + $0x118] sm:$0xff] %v2245
  %2310 = vst [vmem:[%s4 + $0x120] sm:$0xff] %v2246
  %2311 = vst [vmem:[%s4 + $0x128] sm:$0xff] %v2247
  %2312 = vst [vmem:[%s4 + $0x130] sm:$0xff] %v2248
  %2313 = vst [vmem:[%s4 + $0x138] sm:$0xff] %v2249
  %2314 = vst [vmem:[%s4 + $0x140] sm:$0xff] %v2250
  %2315 = vst [vmem:[%s4 + $0x148] sm:$0xff] %v2251
  %2316 = vst [vmem:[%s4 + $0x150] sm:$0xff] %v2252
  %2317 = vst [vmem:[%s4 + $0x158] sm:$0xff] %v2253
  %2318 = vst [vmem:[%s4 + $0x160] sm:$0xff] %v2254
  %2319 = vst [vmem:[%s4 + $0x168] sm:$0xff] %v2255
  %2320 = vst [vmem:[%s4 + $0x170] sm:$0xff] %v2256
  %2321 = vst [vmem:[%s4 + $0x178] sm:$0xff] %v2257
  %2322 = vst [vmem:[%s4 + $0x180] sm:$0xff] %v2258
  %2323 = vst [vmem:[%s4 + $0x188] sm:$0xff] %v2259
  %2324 = vst [vmem:[%s4 + $0x190] sm:$0xff] %v2260
  %2325 = vst [vmem:[%s4 + $0x198] sm:$0xff] %v2261
  %2326 = vst [vmem:[%s4 + $0x1a0] sm:$0xff] %v2262
  %2327 = vst [vmem:[%s4 + $0x1a8] sm:$0xff] %v2263
  %2328 = vst [vmem:[%s4 + $0x1b0] sm:$0xff] %v2264
  %2329 = vst [vmem:[%s4 + $0x1b8] sm:$0xff] %v2265
  %2330 = vst [vmem:[%s4 + $0x1c0] sm:$0xff] %v2266
  %2331 = vst [vmem:[%s4 + $0x1c8] sm:$0xff] %v2267
  %2332 = vst [vmem:[%s4 + $0x1d0] sm:$0xff] %v2268
  %2333 = vst [vmem:[%s4 + $0x1d8] sm:$0xff] %v2269
  %2334 = vst [vmem:[%s4 + $0x1e0] sm:$0xff] %v2270
  %2335 = vst [vmem:[%s4 + $0x1e8] sm:$0xff] %v2271
  %2336 = vst [vmem:[%s4 + $0x1f0] sm:$0xff] %v2272
  %2337 = vst [vmem:[%s4 + $0x1f8] sm:$0xff] %v2273
  // Predicated region
  $region18: #{dense_block_with_atten.1} parent=0 // pred_check
    _
  $region19: #{dense_block_with_atten.1} parent=0 // pred_check_branch
    %2339 = sbr.rel (0) target = $region21
  $region20: #{dense_block_with_atten.1} parent=0 // pred_region
    _
  $region21: #{dense_block_with_atten.1} parent=0 // pred_fallthru
    _
  // Predicated region
  $region22: #{dense_block_with_atten.1} parent=0 // pred_check
    _
  $region23: #{dense_block_with_atten.1} parent=0 // pred_check_branch
    %2341 = sbr.rel (0) target = $region25
  $region24: #{dense_block_with_atten.1} parent=0 // pred_region
    _
  $region25: #{dense_block_with_atten.1} parent=0 // pred_fallthru
    _

</llo_original>
